<compile_context>
chip_gen: v6e
topology: v6e:2x2x1
jax: 0.10.0
libtpu: 0.0.40
codegen_flags: <defaults>
</compile_context>

<pallas_src>
import functools
import math

import jax
import jax.numpy as jnp
from jax import lax
from jax.experimental import pallas as pl
from jax.experimental.pallas import tpu as pltpu


def _tfe_kernel(x_ref, wih_ref, whh_ref, ap_ref, out_ref, xg_ref, *, seq_len, hidden):
    """Fused TFE forward for one batch row.

    x_ref   : (1, T, I)  input sequence for this batch row (VMEM)
    wih_ref : (I, 4H)    W_ih^T, gates packed [i|f|g|o] along lanes (VMEM, grid-invariant)
    whh_ref : (H, 4H)    W_hh^T (VMEM, grid-invariant)
    ap_ref  : (8, H)     attention params broadcast over lanes:
                         rows = [wq*scale, wk, wv, wo, bq*scale, bk, bv, bo]
    out_ref : (1, 1, H)  attention output, lane-major (query positions along lanes)
    xg_ref  : (T, 4H)    VMEM scratch: packed input projection for all timesteps
    """
    T, H = seq_len, hidden

    # ---------------- LSTM (bias=False), gate order i | f | g | o ----------------
    # Packed, lane-dense input projection for ALL timesteps in one MXU matmul.
    xg_ref[...] = jnp.dot(x_ref[0], wih_ref[...], preferred_element_type=jnp.float32)
    whh = whh_ref[...]                                        # (H, 4H), kept live across steps

    def step(t, carry):
        h, c = carry                                          # (1, H) each
        g = xg_ref[pl.ds(t, 1), :] + jnp.dot(h, whh, preferred_element_type=jnp.float32)
        i = jax.nn.sigmoid(g[:, 0 * H:1 * H])
        f = jax.nn.sigmoid(g[:, 1 * H:2 * H])
        u = jnp.tanh(g[:, 2 * H:3 * H])
        o = jax.nn.sigmoid(g[:, 3 * H:4 * H])
        c = f * c + i * u
        h = o * jnp.tanh(c)
        return h, c

    init = (jnp.zeros((1, H), jnp.float32), jnp.zeros((1, H), jnp.float32))
    h, _ = lax.fori_loop(0, T, step, init, unroll=True)       # h == h_n, shape (1, H)

    # ------------- MultiheadAttention(embed_dim=1, num_heads=1) over H "tokens" -------------
    # TODO(synk): nn.Dropout is identity in eval mode; training-mode random masking not implemented.
    wq = ap_ref[0:1, :]
    wk = ap_ref[1:2, :]
    wv = ap_ref[2:3, :]
    wo = ap_ref[3:4, :]
    bq = ap_ref[4:5, :]
    bk = ap_ref[5:6, :]
    bv = ap_ref[6:7, :]
    bo = ap_ref[7:8, :]

    q = wq * h + bq                                           # (1, H); 1/sqrt(head_dim) pre-folded
    k = wk * h + bk                                           # (1, H)
    v = wv * h + bv                                           # (1, H)

    # Scores with keys on sublanes / queries on lanes, built as a TN (rank-1) matmul on the
    # MXU so no in-kernel transpose/relayout is needed:  s[j, i] = k[j] * q[i].
    s = lax.dot_general(k, q, (((0,), (0,)), ((), ())),
                        preferred_element_type=jnp.float32)   # (H, H)
    m = jnp.max(s, axis=0, keepdims=True)                     # (1, H)  max over keys per query
    p = jnp.exp(s - m)                                        # (H, H)  unnormalized softmax
    l = jnp.sum(p, axis=0, keepdims=True)                     # (1, H)  softmax denominator
    o_un = jnp.dot(v, p, preferred_element_type=jnp.float32)  # (1, H)  sum_j v[j] * p[j, i]
    attn = o_un * pl.reciprocal(l, approx=True)               # deferred normalization (EUP)
    out_ref[0] = wo * attn + bo                               # lane-dense (1, H) store


def tfe_forward_pallas(x, w_ih, w_hh, in_proj_w, in_proj_b, out_proj_w, out_proj_b,
                       num_heads=1):
    """TFE forward: x (B, T, input_size) -> (B, hidden_size, 1)."""
    B, T, I = x.shape
    H = w_hh.shape[1]
    assert w_ih.shape == (4 * H, I) and w_hh.shape == (4 * H, H)

    embed_dim = 1                                             # fixed by the TFE module
    assert num_heads == 1 and embed_dim % num_heads == 0, \
        "nn.MultiheadAttention(embed_dim=1) requires num_heads == 1"
    head_dim = embed_dim // num_heads
    scale = 1.0 / math.sqrt(head_dim)

    wq, wk, wv = in_proj_w[0, 0], in_proj_w[1, 0], in_proj_w[2, 0]
    bq, bk, bv = in_proj_b[0], in_proj_b[1], in_proj_b[2]
    wo, bo = out_proj_w[0, 0], out_proj_b[0]
    # Fold the attention scale into the query projection at trace time; broadcast the 8
    # scalars over H lanes so the kernel needs no SMEM/scalar extraction.
    ap = jnp.broadcast_to(
        jnp.stack([wq * scale, wk, wv, wo, bq * scale, bk, bv, bo]
                  ).astype(jnp.float32)[:, None],
        (8, H))

    wih_t = jnp.transpose(w_ih).astype(jnp.float32)           # (I, 4H) lane-dense
    whh_t = jnp.transpose(w_hh).astype(jnp.float32)           # (H, 4H) lane-dense

    kernel = functools.partial(_tfe_kernel, seq_len=T, hidden=H)
    out = pl.pallas_call(
        kernel,
        out_shape=jax.ShapeDtypeStruct((B, 1, H), jnp.float32),
        grid_spec=pltpu.PrefetchScalarGridSpec(
            num_scalar_prefetch=0,
            grid=(B,),
            in_specs=[
                pl.BlockSpec((1, T, I), lambda b: (b, 0, 0)),   # one batch row per grid step
                pl.BlockSpec((I, 4 * H), lambda b: (0, 0)),     # W_ih^T (resident, no re-DMA)
                pl.BlockSpec((H, 4 * H), lambda b: (0, 0)),     # W_hh^T (resident)
                pl.BlockSpec((8, H), lambda b: (0, 0)),         # attention params (resident)
            ],
            out_specs=pl.BlockSpec((1, 1, H), lambda b: (b, 0, 0)),
            scratch_shapes=[pltpu.VMEM((T, 4 * H), jnp.float32)],
        ),
        compiler_params=pltpu.CompilerParams(dimension_semantics=("parallel",)),
    )(x.astype(jnp.float32), wih_t, whh_t, ap)

    # (B, 1, H) lane-major kernel output -> (B, H, 1) to match the PyTorch module.
    return jnp.transpose(out, (0, 2, 1))


def tfe_reference(x, w_ih, w_hh, in_proj_w, in_proj_b, out_proj_w, out_proj_b):
    """Plain-JAX replica of the PyTorch TFE forward (eval mode)."""
    B, T, _ = x.shape
    H = w_hh.shape[1]
    h = jnp.zeros((B, H), jnp.float32)
    c = jnp.zeros((B, H), jnp.float32)
    for t in range(T):                                        # nn.LSTM, bias=False, gates i|f|g|o
        g = x[:, t, :] @ w_ih.T + h @ w_hh.T
        i, f, u, o = jnp.split(g, 4, axis=-1)
        i, f, o = jax.nn.sigmoid(i), jax.nn.sigmoid(f), jax.nn.sigmoid(o)
        u = jnp.tanh(u)
        c = f * c + i * u
        h = o * jnp.tanh(c)
    seq = h[:, :, None]                                       # h_n -> (B, H, 1); dropout = identity
    q = seq * in_proj_w[0, 0] + in_proj_b[0]
    k = seq * in_proj_w[1, 0] + in_proj_b[1]
    v = seq * in_proj_w[2, 0] + in_proj_b[2]
    s = q @ jnp.swapaxes(k, 1, 2)                             # head_dim = 1 -> scale = 1
    p = jax.nn.softmax(s, axis=-1)
    attn = p @ v                                              # (B, H, 1)
    return attn * out_proj_w[0, 0] + out_proj_b[0]


if __name__ == "__main__":
    B, T, I, H = 2, 8, 16, 32       # batch=2, seq=8, input_size=16, hidden_size=32
    num_heads = 1                   # embed_dim=1 in TFE forces num_heads == 1

    key = jax.random.PRNGKey(0)
    k1, k2, k3, k4, k5, k6, k7 = jax.random.split(key, 7)

    x = jax.random.normal(k1, (B, T, I), dtype=jnp.float32)
    s_ih = 1.0 / math.sqrt(H)
    w_ih = s_ih * jax.random.normal(k2, (4 * H, I), dtype=jnp.float32)    # lstm.weight_ih_l0
    w_hh = s_ih * jax.random.normal(k3, (4 * H, H), dtype=jnp.float32)    # lstm.weight_hh_l0
    in_proj_w = 0.5 * jax.random.normal(k4, (3, 1), dtype=jnp.float32)    # mha in_proj_weight
    in_proj_b = 0.5 * jax.random.normal(k5, (3,), dtype=jnp.float32)      # mha in_proj_bias
    out_proj_w = 0.5 * jax.random.normal(k6, (1, 1), dtype=jnp.float32)   # mha out_proj.weight
    out_proj_b = 0.5 * jax.random.normal(k7, (1,), dtype=jnp.float32)     # mha out_proj.bias

    y = tfe_forward_pallas(x, w_ih, w_hh, in_proj_w, in_proj_b,
                           out_proj_w, out_proj_b, num_heads)
    y = jax.block_until_ready(y)

    ref = tfe_reference(x, w_ih, w_hh, in_proj_w, in_proj_b, out_proj_w, out_proj_b)
    assert y.shape == (B, H, 1), y.shape
    max_err = float(jnp.max(jnp.abs(y - ref)))
    assert jnp.allclose(y, ref, atol=5e-3, rtol=5e-3), max_err

    print("KERNEL_OK")
</pallas_src>

<mosaic_0001>
module attributes {stable_mosaic.version = 11 : i64} {
  func.func @_tfe_kernel(%arg0: i32, %arg1: memref<1x8x16xf32, #tpu.memory_space<vmem>>, %arg2: memref<16x128xf32, #tpu.memory_space<vmem>>, %arg3: memref<32x128xf32, #tpu.memory_space<vmem>>, %arg4: memref<8x32xf32, #tpu.memory_space<vmem>>, %arg5: memref<1x1x32xf32, #tpu.memory_space<vmem>>, %arg6: memref<8x128xf32, #tpu.memory_space<vmem>>) attributes {dimension_semantics = [#tpu.dimension_semantics<parallel>], iteration_bounds = array<i64: 2>, scalar_prefetch = 0 : i64, scratch_operands = 1 : i64, tpu.core_type = #tpu.core_type<tc>, window_params = [{transform_indices = @transform_0, window_bounds = array<i64: 1, 8, 16>}, {pipeline_mode = #tpu.pipeline_mode<synchronous>, transform_indices = @transform_1, window_bounds = array<i64: 16, 128>}, {pipeline_mode = #tpu.pipeline_mode<synchronous>, transform_indices = @transform_2, window_bounds = array<i64: 32, 128>}, {pipeline_mode = #tpu.pipeline_mode<synchronous>, transform_indices = @transform_3, window_bounds = array<i64: 8, 32>}, {transform_indices = @transform_4, window_bounds = array<i64: 1, 1, 32>}]} {
    %c0 = arith.constant 0 : index
    %c0_0 = arith.constant 0 : index
    %c0_1 = arith.constant 0 : index
    %0 = vector.load %arg1[%c0, %c0_0, %c0_1] : memref<1x8x16xf32, #tpu.memory_space<vmem>>, vector<1x8x16xf32>
    %1 = vector.shape_cast %0 : vector<1x8x16xf32> to vector<8x16xf32>
    %c0_2 = arith.constant 0 : index
    %c0_3 = arith.constant 0 : index
    %2 = vector.load %arg2[%c0_2, %c0_3] : memref<16x128xf32, #tpu.memory_space<vmem>>, vector<16x128xf32>
    %cst = arith.constant dense<0.000000e+00> : vector<8x128xf32>
    %3 = tpu.matmul %1, %2, %cst {dimension_numbers = #tpu.dot_dimension_numbers<[1], [0], [0], [1], [0, 0, 1, 1], [], []>} : vector<8x16xf32>, vector<16x128xf32>, vector<8x128xf32> -> vector<8x128xf32>
    %c0_4 = arith.constant 0 : index
    %c0_5 = arith.constant 0 : index
    %4 = vector.load %arg6[%c0_4, %c0_5] : memref<8x128xf32, #tpu.memory_space<vmem>>, vector<8x128xf32>
    tpu.vector_store %arg6[%c0_4, %c0_5], %3 {strides = array<i32>} : memref<8x128xf32, #tpu.memory_space<vmem>>, vector<8x128xf32>,
    %c0_6 = arith.constant 0 : index
    %c0_7 = arith.constant 0 : index
    %5 = vector.load %arg3[%c0_6, %c0_7] : memref<32x128xf32, #tpu.memory_space<vmem>>, vector<32x128xf32>
    %cst_8 = arith.constant 0.000000e+00 : f32
    %6 = vector.broadcast %cst_8 : f32 to vector<1x32xf32>
    %cst_9 = arith.constant 0.000000e+00 : f32
    %7 = vector.broadcast %cst_9 : f32 to vector<1x32xf32>
    %c0_i32 = arith.constant 0 : i32
    %8 = arith.index_cast %c0_i32 : i32 to index
    %c0_10 = arith.constant 0 : index
    %9 = vector.load %arg6[%8, %c0_10] : memref<8x128xf32, #tpu.memory_space<vmem>>, vector<1x128xf32>
    %cst_11 = arith.constant dense<0.000000e+00> : vector<1x128xf32>
    %10 = tpu.matmul %6, %5, %cst_11 {dimension_numbers = #tpu.dot_dimension_numbers<[1], [0], [0], [1], [0, 0, 1, 1], [], []>} : vector<1x32xf32>, vector<32x128xf32>, vector<1x128xf32> -> vector<1x128xf32>
    %11 = arith.addf %9, %10 : vector<1x128xf32>
    %12 = vector.extract_strided_slice %11 {offsets = [0, 0], sizes = [1, 32], strides = [1, 1]} : vector<1x128xf32> to vector<1x32xf32>
    %13 = arith.negf %12 : vector<1x32xf32>
    %14 = math.exp %13 : vector<1x32xf32>
    %cst_12 = arith.constant 1.000000e+00 : f32
    %15 = vector.broadcast %cst_12 : f32 to vector<1x32xf32>
    %16 = arith.addf %15, %14 : vector<1x32xf32>
    %17 = arith.divf %15, %16 : vector<1x32xf32>
    %18 = vector.extract_strided_slice %11 {offsets = [0, 32], sizes = [1, 32], strides = [1, 1]} : vector<1x128xf32> to vector<1x32xf32>
    %19 = arith.negf %18 : vector<1x32xf32>
    %20 = math.exp %19 : vector<1x32xf32>
    %cst_13 = arith.constant 1.000000e+00 : f32
    %21 = vector.broadcast %cst_13 : f32 to vector<1x32xf32>
    %22 = arith.addf %21, %20 : vector<1x32xf32>
    %23 = arith.divf %21, %22 : vector<1x32xf32>
    %24 = vector.extract_strided_slice %11 {offsets = [0, 64], sizes = [1, 32], strides = [1, 1]} : vector<1x128xf32> to vector<1x32xf32>
    %25 = math.tanh %24 : vector<1x32xf32>
    %26 = vector.extract_strided_slice %11 {offsets = [0, 96], sizes = [1, 32], strides = [1, 1]} : vector<1x128xf32> to vector<1x32xf32>
    %27 = arith.negf %26 : vector<1x32xf32>
    %28 = math.exp %27 : vector<1x32xf32>
    %cst_14 = arith.constant 1.000000e+00 : f32
    %29 = vector.broadcast %cst_14 : f32 to vector<1x32xf32>
    %30 = arith.addf %29, %28 : vector<1x32xf32>
    %31 = arith.divf %29, %30 : vector<1x32xf32>
    %32 = arith.mulf %23, %7 : vector<1x32xf32>
    %33 = arith.mulf %17, %25 : vector<1x32xf32>
    %34 = arith.addf %32, %33 : vector<1x32xf32>
    %35 = math.tanh %34 : vector<1x32xf32>
    %36 = arith.mulf %31, %35 : vector<1x32xf32>
    %c1_i32 = arith.constant 1 : i32
    %37 = arith.index_cast %c1_i32 : i32 to index
    %c0_15 = arith.constant 0 : index
    %38 = vector.load %arg6[%37, %c0_15] : memref<8x128xf32, #tpu.memory_space<vmem>>, vector<1x128xf32>
    %cst_16 = arith.constant dense<0.000000e+00> : vector<1x128xf32>
    %39 = tpu.matmul %36, %5, %cst_16 {dimension_numbers = #tpu.dot_dimension_numbers<[1], [0], [0], [1], [0, 0, 1, 1], [], []>} : vector<1x32xf32>, vector<32x128xf32>, vector<1x128xf32> -> vector<1x128xf32>
    %40 = arith.addf %38, %39 : vector<1x128xf32>
    %41 = vector.extract_strided_slice %40 {offsets = [0, 0], sizes = [1, 32], strides = [1, 1]} : vector<1x128xf32> to vector<1x32xf32>
    %42 = arith.negf %41 : vector<1x32xf32>
    %43 = math.exp %42 : vector<1x32xf32>
    %cst_17 = arith.constant 1.000000e+00 : f32
    %44 = vector.broadcast %cst_17 : f32 to vector<1x32xf32>
    %45 = arith.addf %44, %43 : vector<1x32xf32>
    %46 = arith.divf %44, %45 : vector<1x32xf32>
    %47 = vector.extract_strided_slice %40 {offsets = [0, 32], sizes = [1, 32], strides = [1, 1]} : vector<1x128xf32> to vector<1x32xf32>
    %48 = arith.negf %47 : vector<1x32xf32>
    %49 = math.exp %48 : vector<1x32xf32>
    %cst_18 = arith.constant 1.000000e+00 : f32
    %50 = vector.broadcast %cst_18 : f32 to vector<1x32xf32>
    %51 = arith.addf %50, %49 : vector<1x32xf32>
    %52 = arith.divf %50, %51 : vector<1x32xf32>
    %53 = vector.extract_strided_slice %40 {offsets = [0, 64], sizes = [1, 32], strides = [1, 1]} : vector<1x128xf32> to vector<1x32xf32>
    %54 = math.tanh %53 : vector<1x32xf32>
    %55 = vector.extract_strided_slice %40 {offsets = [0, 96], sizes = [1, 32], strides = [1, 1]} : vector<1x128xf32> to vector<1x32xf32>
    %56 = arith.negf %55 : vector<1x32xf32>
    %57 = math.exp %56 : vector<1x32xf32>
    %cst_19 = arith.constant 1.000000e+00 : f32
    %58 = vector.broadcast %cst_19 : f32 to vector<1x32xf32>
    %59 = arith.addf %58, %57 : vector<1x32xf32>
    %60 = arith.divf %58, %59 : vector<1x32xf32>
    %61 = arith.mulf %52, %34 : vector<1x32xf32>
    %62 = arith.mulf %46, %54 : vector<1x32xf32>
    %63 = arith.addf %61, %62 : vector<1x32xf32>
    %64 = math.tanh %63 : vector<1x32xf32>
    %65 = arith.mulf %60, %64 : vector<1x32xf32>
    %c2_i32 = arith.constant 2 : i32
    %66 = arith.index_cast %c2_i32 : i32 to index
    %c0_20 = arith.constant 0 : index
    %67 = vector.load %arg6[%66, %c0_20] : memref<8x128xf32, #tpu.memory_space<vmem>>, vector<1x128xf32>
    %cst_21 = arith.constant dense<0.000000e+00> : vector<1x128xf32>
    %68 = tpu.matmul %65, %5, %cst_21 {dimension_numbers = #tpu.dot_dimension_numbers<[1], [0], [0], [1], [0, 0, 1, 1], [], []>} : vector<1x32xf32>, vector<32x128xf32>, vector<1x128xf32> -> vector<1x128xf32>
    %69 = arith.addf %67, %68 : vector<1x128xf32>
    %70 = vector.extract_strided_slice %69 {offsets = [0, 0], sizes = [1, 32], strides = [1, 1]} : vector<1x128xf32> to vector<1x32xf32>
    %71 = arith.negf %70 : vector<1x32xf32>
    %72 = math.exp %71 : vector<1x32xf32>
    %cst_22 = arith.constant 1.000000e+00 : f32
    %73 = vector.broadcast %cst_22 : f32 to vector<1x32xf32>
    %74 = arith.addf %73, %72 : vector<1x32xf32>
    %75 = arith.divf %73, %74 : vector<1x32xf32>
    %76 = vector.extract_strided_slice %69 {offsets = [0, 32], sizes = [1, 32], strides = [1, 1]} : vector<1x128xf32> to vector<1x32xf32>
    %77 = arith.negf %76 : vector<1x32xf32>
    %78 = math.exp %77 : vector<1x32xf32>
    %cst_23 = arith.constant 1.000000e+00 : f32
    %79 = vector.broadcast %cst_23 : f32 to vector<1x32xf32>
    %80 = arith.addf %79, %78 : vector<1x32xf32>
    %81 = arith.divf %79, %80 : vector<1x32xf32>
    %82 = vector.extract_strided_slice %69 {offsets = [0, 64], sizes = [1, 32], strides = [1, 1]} : vector<1x128xf32> to vector<1x32xf32>
    %83 = math.tanh %82 : vector<1x32xf32>
    %84 = vector.extract_strided_slice %69 {offsets = [0, 96], sizes = [1, 32], strides = [1, 1]} : vector<1x128xf32> to vector<1x32xf32>
    %85 = arith.negf %84 : vector<1x32xf32>
    %86 = math.exp %85 : vector<1x32xf32>
    %cst_24 = arith.constant 1.000000e+00 : f32
    %87 = vector.broadcast %cst_24 : f32 to vector<1x32xf32>
    %88 = arith.addf %87, %86 : vector<1x32xf32>
    %89 = arith.divf %87, %88 : vector<1x32xf32>
    %90 = arith.mulf %81, %63 : vector<1x32xf32>
    %91 = arith.mulf %75, %83 : vector<1x32xf32>
    %92 = arith.addf %90, %91 : vector<1x32xf32>
    %93 = math.tanh %92 : vector<1x32xf32>
    %94 = arith.mulf %89, %93 : vector<1x32xf32>
    %c3_i32 = arith.constant 3 : i32
    %95 = arith.index_cast %c3_i32 : i32 to index
    %c0_25 = arith.constant 0 : index
    %96 = vector.load %arg6[%95, %c0_25] : memref<8x128xf32, #tpu.memory_space<vmem>>, vector<1x128xf32>
    %cst_26 = arith.constant dense<0.000000e+00> : vector<1x128xf32>
    %97 = tpu.matmul %94, %5, %cst_26 {dimension_numbers = #tpu.dot_dimension_numbers<[1], [0], [0], [1], [0, 0, 1, 1], [], []>} : vector<1x32xf32>, vector<32x128xf32>, vector<1x128xf32> -> vector<1x128xf32>
    %98 = arith.addf %96, %97 : vector<1x128xf32>
    %99 = vector.extract_strided_slice %98 {offsets = [0, 0], sizes = [1, 32], strides = [1, 1]} : vector<1x128xf32> to vector<1x32xf32>
    %100 = arith.negf %99 : vector<1x32xf32>
    %101 = math.exp %100 : vector<1x32xf32>
    %cst_27 = arith.constant 1.000000e+00 : f32
    %102 = vector.broadcast %cst_27 : f32 to vector<1x32xf32>
    %103 = arith.addf %102, %101 : vector<1x32xf32>
    %104 = arith.divf %102, %103 : vector<1x32xf32>
    %105 = vector.extract_strided_slice %98 {offsets = [0, 32], sizes = [1, 32], strides = [1, 1]} : vector<1x128xf32> to vector<1x32xf32>
    %106 = arith.negf %105 : vector<1x32xf32>
    %107 = math.exp %106 : vector<1x32xf32>
    %cst_28 = arith.constant 1.000000e+00 : f32
    %108 = vector.broadcast %cst_28 : f32 to vector<1x32xf32>
    %109 = arith.addf %108, %107 : vector<1x32xf32>
    %110 = arith.divf %108, %109 : vector<1x32xf32>
    %111 = vector.extract_strided_slice %98 {offsets = [0, 64], sizes = [1, 32], strides = [1, 1]} : vector<1x128xf32> to vector<1x32xf32>
    %112 = math.tanh %111 : vector<1x32xf32>
    %113 = vector.extract_strided_slice %98 {offsets = [0, 96], sizes = [1, 32], strides = [1, 1]} : vector<1x128xf32> to vector<1x32xf32>
    %114 = arith.negf %113 : vector<1x32xf32>
    %115 = math.exp %114 : vector<1x32xf32>
    %cst_29 = arith.constant 1.000000e+00 : f32
    %116 = vector.broadcast %cst_29 : f32 to vector<1x32xf32>
    %117 = arith.addf %116, %115 : vector<1x32xf32>
    %118 = arith.divf %116, %117 : vector<1x32xf32>
    %119 = arith.mulf %110, %92 : vector<1x32xf32>
    %120 = arith.mulf %104, %112 : vector<1x32xf32>
    %121 = arith.addf %119, %120 : vector<1x32xf32>
    %122 = math.tanh %121 : vector<1x32xf32>
    %123 = arith.mulf %118, %122 : vector<1x32xf32>
    %c4_i32 = arith.constant 4 : i32
    %124 = arith.index_cast %c4_i32 : i32 to index
    %c0_30 = arith.constant 0 : index
    %125 = vector.load %arg6[%124, %c0_30] : memref<8x128xf32, #tpu.memory_space<vmem>>, vector<1x128xf32>
    %cst_31 = arith.constant dense<0.000000e+00> : vector<1x128xf32>
    %126 = tpu.matmul %123, %5, %cst_31 {dimension_numbers = #tpu.dot_dimension_numbers<[1], [0], [0], [1], [0, 0, 1, 1], [], []>} : vector<1x32xf32>, vector<32x128xf32>, vector<1x128xf32> -> vector<1x128xf32>
    %127 = arith.addf %125, %126 : vector<1x128xf32>
    %128 = vector.extract_strided_slice %127 {offsets = [0, 0], sizes = [1, 32], strides = [1, 1]} : vector<1x128xf32> to vector<1x32xf32>
    %129 = arith.negf %128 : vector<1x32xf32>
    %130 = math.exp %129 : vector<1x32xf32>
    %cst_32 = arith.constant 1.000000e+00 : f32
    %131 = vector.broadcast %cst_32 : f32 to vector<1x32xf32>
    %132 = arith.addf %131, %130 : vector<1x32xf32>
    %133 = arith.divf %131, %132 : vector<1x32xf32>
    %134 = vector.extract_strided_slice %127 {offsets = [0, 32], sizes = [1, 32], strides = [1, 1]} : vector<1x128xf32> to vector<1x32xf32>
    %135 = arith.negf %134 : vector<1x32xf32>
    %136 = math.exp %135 : vector<1x32xf32>
    %cst_33 = arith.constant 1.000000e+00 : f32
    %137 = vector.broadcast %cst_33 : f32 to vector<1x32xf32>
    %138 = arith.addf %137, %136 : vector<1x32xf32>
    %139 = arith.divf %137, %138 : vector<1x32xf32>
    %140 = vector.extract_strided_slice %127 {offsets = [0, 64], sizes = [1, 32], strides = [1, 1]} : vector<1x128xf32> to vector<1x32xf32>
    %141 = math.tanh %140 : vector<1x32xf32>
    %142 = vector.extract_strided_slice %127 {offsets = [0, 96], sizes = [1, 32], strides = [1, 1]} : vector<1x128xf32> to vector<1x32xf32>
    %143 = arith.negf %142 : vector<1x32xf32>
    %144 = math.exp %143 : vector<1x32xf32>
    %cst_34 = arith.constant 1.000000e+00 : f32
    %145 = vector.broadcast %cst_34 : f32 to vector<1x32xf32>
    %146 = arith.addf %145, %144 : vector<1x32xf32>
    %147 = arith.divf %145, %146 : vector<1x32xf32>
    %148 = arith.mulf %139, %121 : vector<1x32xf32>
    %149 = arith.mulf %133, %141 : vector<1x32xf32>
    %150 = arith.addf %148, %149 : vector<1x32xf32>
    %151 = math.tanh %150 : vector<1x32xf32>
    %152 = arith.mulf %147, %151 : vector<1x32xf32>
    %c5_i32 = arith.constant 5 : i32
    %153 = arith.index_cast %c5_i32 : i32 to index
    %c0_35 = arith.constant 0 : index
    %154 = vector.load %arg6[%153, %c0_35] : memref<8x128xf32, #tpu.memory_space<vmem>>, vector<1x128xf32>
    %cst_36 = arith.constant dense<0.000000e+00> : vector<1x128xf32>
    %155 = tpu.matmul %152, %5, %cst_36 {dimension_numbers = #tpu.dot_dimension_numbers<[1], [0], [0], [1], [0, 0, 1, 1], [], []>} : vector<1x32xf32>, vector<32x128xf32>, vector<1x128xf32> -> vector<1x128xf32>
    %156 = arith.addf %154, %155 : vector<1x128xf32>
    %157 = vector.extract_strided_slice %156 {offsets = [0, 0], sizes = [1, 32], strides = [1, 1]} : vector<1x128xf32> to vector<1x32xf32>
    %158 = arith.negf %157 : vector<1x32xf32>
    %159 = math.exp %158 : vector<1x32xf32>
    %cst_37 = arith.constant 1.000000e+00 : f32
    %160 = vector.broadcast %cst_37 : f32 to vector<1x32xf32>
    %161 = arith.addf %160, %159 : vector<1x32xf32>
    %162 = arith.divf %160, %161 : vector<1x32xf32>
    %163 = vector.extract_strided_slice %156 {offsets = [0, 32], sizes = [1, 32], strides = [1, 1]} : vector<1x128xf32> to vector<1x32xf32>
    %164 = arith.negf %163 : vector<1x32xf32>
    %165 = math.exp %164 : vector<1x32xf32>
    %cst_38 = arith.constant 1.000000e+00 : f32
    %166 = vector.broadcast %cst_38 : f32 to vector<1x32xf32>
    %167 = arith.addf %166, %165 : vector<1x32xf32>
    %168 = arith.divf %166, %167 : vector<1x32xf32>
    %169 = vector.extract_strided_slice %156 {offsets = [0, 64], sizes = [1, 32], strides = [1, 1]} : vector<1x128xf32> to vector<1x32xf32>
    %170 = math.tanh %169 : vector<1x32xf32>
    %171 = vector.extract_strided_slice %156 {offsets = [0, 96], sizes = [1, 32], strides = [1, 1]} : vector<1x128xf32> to vector<1x32xf32>
    %172 = arith.negf %171 : vector<1x32xf32>
    %173 = math.exp %172 : vector<1x32xf32>
    %cst_39 = arith.constant 1.000000e+00 : f32
    %174 = vector.broadcast %cst_39 : f32 to vector<1x32xf32>
    %175 = arith.addf %174, %173 : vector<1x32xf32>
    %176 = arith.divf %174, %175 : vector<1x32xf32>
    %177 = arith.mulf %168, %150 : vector<1x32xf32>
    %178 = arith.mulf %162, %170 : vector<1x32xf32>
    %179 = arith.addf %177, %178 : vector<1x32xf32>
    %180 = math.tanh %179 : vector<1x32xf32>
    %181 = arith.mulf %176, %180 : vector<1x32xf32>
    %c6_i32 = arith.constant 6 : i32
    %182 = arith.index_cast %c6_i32 : i32 to index
    %c0_40 = arith.constant 0 : index
    %183 = vector.load %arg6[%182, %c0_40] : memref<8x128xf32, #tpu.memory_space<vmem>>, vector<1x128xf32>
    %cst_41 = arith.constant dense<0.000000e+00> : vector<1x128xf32>
    %184 = tpu.matmul %181, %5, %cst_41 {dimension_numbers = #tpu.dot_dimension_numbers<[1], [0], [0], [1], [0, 0, 1, 1], [], []>} : vector<1x32xf32>, vector<32x128xf32>, vector<1x128xf32> -> vector<1x128xf32>
    %185 = arith.addf %183, %184 : vector<1x128xf32>
    %186 = vector.extract_strided_slice %185 {offsets = [0, 0], sizes = [1, 32], strides = [1, 1]} : vector<1x128xf32> to vector<1x32xf32>
    %187 = arith.negf %186 : vector<1x32xf32>
    %188 = math.exp %187 : vector<1x32xf32>
    %cst_42 = arith.constant 1.000000e+00 : f32
    %189 = vector.broadcast %cst_42 : f32 to vector<1x32xf32>
    %190 = arith.addf %189, %188 : vector<1x32xf32>
    %191 = arith.divf %189, %190 : vector<1x32xf32>
    %192 = vector.extract_strided_slice %185 {offsets = [0, 32], sizes = [1, 32], strides = [1, 1]} : vector<1x128xf32> to vector<1x32xf32>
    %193 = arith.negf %192 : vector<1x32xf32>
    %194 = math.exp %193 : vector<1x32xf32>
    %cst_43 = arith.constant 1.000000e+00 : f32
    %195 = vector.broadcast %cst_43 : f32 to vector<1x32xf32>
    %196 = arith.addf %195, %194 : vector<1x32xf32>
    %197 = arith.divf %195, %196 : vector<1x32xf32>
    %198 = vector.extract_strided_slice %185 {offsets = [0, 64], sizes = [1, 32], strides = [1, 1]} : vector<1x128xf32> to vector<1x32xf32>
    %199 = math.tanh %198 : vector<1x32xf32>
    %200 = vector.extract_strided_slice %185 {offsets = [0, 96], sizes = [1, 32], strides = [1, 1]} : vector<1x128xf32> to vector<1x32xf32>
    %201 = arith.negf %200 : vector<1x32xf32>
    %202 = math.exp %201 : vector<1x32xf32>
    %cst_44 = arith.constant 1.000000e+00 : f32
    %203 = vector.broadcast %cst_44 : f32 to vector<1x32xf32>
    %204 = arith.addf %203, %202 : vector<1x32xf32>
    %205 = arith.divf %203, %204 : vector<1x32xf32>
    %206 = arith.mulf %197, %179 : vector<1x32xf32>
    %207 = arith.mulf %191, %199 : vector<1x32xf32>
    %208 = arith.addf %206, %207 : vector<1x32xf32>
    %209 = math.tanh %208 : vector<1x32xf32>
    %210 = arith.mulf %205, %209 : vector<1x32xf32>
    %c7_i32 = arith.constant 7 : i32
    %211 = arith.index_cast %c7_i32 : i32 to index
    %c0_45 = arith.constant 0 : index
    %212 = vector.load %arg6[%211, %c0_45] : memref<8x128xf32, #tpu.memory_space<vmem>>, vector<1x128xf32>
    %cst_46 = arith.constant dense<0.000000e+00> : vector<1x128xf32>
    %213 = tpu.matmul %210, %5, %cst_46 {dimension_numbers = #tpu.dot_dimension_numbers<[1], [0], [0], [1], [0, 0, 1, 1], [], []>} : vector<1x32xf32>, vector<32x128xf32>, vector<1x128xf32> -> vector<1x128xf32>
    %214 = arith.addf %212, %213 : vector<1x128xf32>
    %215 = vector.extract_strided_slice %214 {offsets = [0, 0], sizes = [1, 32], strides = [1, 1]} : vector<1x128xf32> to vector<1x32xf32>
    %216 = arith.negf %215 : vector<1x32xf32>
    %217 = math.exp %216 : vector<1x32xf32>
    %cst_47 = arith.constant 1.000000e+00 : f32
    %218 = vector.broadcast %cst_47 : f32 to vector<1x32xf32>
    %219 = arith.addf %218, %217 : vector<1x32xf32>
    %220 = arith.divf %218, %219 : vector<1x32xf32>
    %221 = vector.extract_strided_slice %214 {offsets = [0, 32], sizes = [1, 32], strides = [1, 1]} : vector<1x128xf32> to vector<1x32xf32>
    %222 = arith.negf %221 : vector<1x32xf32>
    %223 = math.exp %222 : vector<1x32xf32>
    %cst_48 = arith.constant 1.000000e+00 : f32
    %224 = vector.broadcast %cst_48 : f32 to vector<1x32xf32>
    %225 = arith.addf %224, %223 : vector<1x32xf32>
    %226 = arith.divf %224, %225 : vector<1x32xf32>
    %227 = vector.extract_strided_slice %214 {offsets = [0, 64], sizes = [1, 32], strides = [1, 1]} : vector<1x128xf32> to vector<1x32xf32>
    %228 = math.tanh %227 : vector<1x32xf32>
    %229 = vector.extract_strided_slice %214 {offsets = [0, 96], sizes = [1, 32], strides = [1, 1]} : vector<1x128xf32> to vector<1x32xf32>
    %230 = arith.negf %229 : vector<1x32xf32>
    %231 = math.exp %230 : vector<1x32xf32>
    %cst_49 = arith.constant 1.000000e+00 : f32
    %232 = vector.broadcast %cst_49 : f32 to vector<1x32xf32>
    %233 = arith.addf %232, %231 : vector<1x32xf32>
    %234 = arith.divf %232, %233 : vector<1x32xf32>
    %235 = arith.mulf %226, %208 : vector<1x32xf32>
    %236 = arith.mulf %220, %228 : vector<1x32xf32>
    %237 = arith.addf %235, %236 : vector<1x32xf32>
    %238 = math.tanh %237 : vector<1x32xf32>
    %239 = arith.mulf %234, %238 : vector<1x32xf32>
    %c8_i32 = arith.constant 8 : i32
    %c0_50 = arith.constant 0 : index
    %c0_51 = arith.constant 0 : index
    %240 = vector.load %arg4[%c0_50, %c0_51] : memref<8x32xf32, #tpu.memory_space<vmem>>, vector<1x32xf32>
    %c1 = arith.constant 1 : index
    %c0_52 = arith.constant 0 : index
    %241 = vector.load %arg4[%c1, %c0_52] : memref<8x32xf32, #tpu.memory_space<vmem>>, vector<1x32xf32>
    %c2 = arith.constant 2 : index
    %c0_53 = arith.constant 0 : index
    %242 = vector.load %arg4[%c2, %c0_53] : memref<8x32xf32, #tpu.memory_space<vmem>>, vector<1x32xf32>
    %c3 = arith.constant 3 : index
    %c0_54 = arith.constant 0 : index
    %243 = vector.load %arg4[%c3, %c0_54] : memref<8x32xf32, #tpu.memory_space<vmem>>, vector<1x32xf32>
    %c4 = arith.constant 4 : index
    %c0_55 = arith.constant 0 : index
    %244 = vector.load %arg4[%c4, %c0_55] : memref<8x32xf32, #tpu.memory_space<vmem>>, vector<1x32xf32>
    %c5 = arith.constant 5 : index
    %c0_56 = arith.constant 0 : index
    %245 = vector.load %arg4[%c5, %c0_56] : memref<8x32xf32, #tpu.memory_space<vmem>>, vector<1x32xf32>
    %c6 = arith.constant 6 : index
    %c0_57 = arith.constant 0 : index
    %246 = vector.load %arg4[%c6, %c0_57] : memref<8x32xf32, #tpu.memory_space<vmem>>, vector<1x32xf32>
    %c7 = arith.constant 7 : index
    %c0_58 = arith.constant 0 : index
    %247 = vector.load %arg4[%c7, %c0_58] : memref<8x32xf32, #tpu.memory_space<vmem>>, vector<1x32xf32>
    %248 = arith.mulf %240, %239 : vector<1x32xf32>
    %249 = arith.addf %248, %244 : vector<1x32xf32>
    %250 = arith.mulf %241, %239 : vector<1x32xf32>
    %251 = arith.addf %250, %245 : vector<1x32xf32>
    %252 = arith.mulf %242, %239 : vector<1x32xf32>
    %253 = arith.addf %252, %246 : vector<1x32xf32>
    %cst_59 = arith.constant dense<0.000000e+00> : vector<32x32xf32>
    %254 = tpu.matmul %251, %249, %cst_59 {dimension_numbers = #tpu.dot_dimension_numbers<[0], [0], [1], [1], [0, 1, 1, 1], [], []>} : vector<1x32xf32>, vector<1x32xf32>, vector<32x32xf32> -> vector<32x32xf32>
    %cst_60 = arith.constant dense<0xFF800000> : vector<32xf32>
    %255 = vector.multi_reduction <maximumf>, %254, %cst_60 [0] : vector<32x32xf32> to vector<32xf32>
    %256 = vector.shape_cast %255 : vector<32xf32> to vector<1x32xf32>
    %257 = vector.broadcast %256 : vector<1x32xf32> to vector<32x32xf32>
    %258 = arith.subf %254, %257 : vector<32x32xf32>
    %259 = math.exp %258 : vector<32x32xf32>
    %cst_61 = arith.constant dense<0.000000e+00> : vector<32xf32>
    %260 = vector.multi_reduction <add>, %259, %cst_61 [0] : vector<32x32xf32> to vector<32xf32>
    %261 = vector.shape_cast %260 : vector<32xf32> to vector<1x32xf32>
    %cst_62 = arith.constant dense<0.000000e+00> : vector<1x32xf32>
    %262 = tpu.matmul %253, %259, %cst_62 {dimension_numbers = #tpu.dot_dimension_numbers<[1], [0], [0], [1], [0, 0, 1, 1], [], []>} : vector<1x32xf32>, vector<32x32xf32>, vector<1x32xf32> -> vector<1x32xf32>
    %263 = tpu.reciprocal %261 {approx = true} : vector<1x32xf32> -> vector<1x32xf32>
    %264 = arith.mulf %262, %263 : vector<1x32xf32>
    %265 = arith.mulf %243, %264 : vector<1x32xf32>
    %266 = arith.addf %265, %247 : vector<1x32xf32>
    %c0_63 = arith.constant 0 : index
    %c0_64 = arith.constant 0 : index
    %c0_65 = arith.constant 0 : index
    %267 = vector.load %arg5[%c0_63, %c0_64, %c0_65] : memref<1x1x32xf32, #tpu.memory_space<vmem>>, vector<1x1x32xf32>
    %268 = vector.shape_cast %267 : vector<1x1x32xf32> to vector<1x32xf32>
    %269 = vector.shape_cast %266 : vector<1x32xf32> to vector<1x1x32xf32>
    tpu.vector_store %arg5[%c0_63, %c0_64, %c0_65], %269 {strides = array<i32>} : memref<1x1x32xf32, #tpu.memory_space<vmem>>, vector<1x1x32xf32>,
    return
  }
  func.func @transform_0(%arg0: i32) -> (i32, i32, i32) {
    %c0_i32 = arith.constant 0 : i32
    %c0_i32_0 = arith.constant 0 : i32
    %c0_i32_1 = arith.constant 0 : i32
    return %arg0, %c0_i32, %c0_i32_0 : i32, i32, i32
  }
  func.func @transform_1(%arg0: i32) -> (i32, i32) {
    %c0_i32 = arith.constant 0 : i32
    %c0_i32_0 = arith.constant 0 : i32
    %c0_i32_1 = arith.constant 0 : i32
    return %c0_i32, %c0_i32_0 : i32, i32
  }
  func.func @transform_2(%arg0: i32) -> (i32, i32) {
    %c0_i32 = arith.constant 0 : i32
    %c0_i32_0 = arith.constant 0 : i32
    %c0_i32_1 = arith.constant 0 : i32
    return %c0_i32, %c0_i32_0 : i32, i32
  }
  func.func @transform_3(%arg0: i32) -> (i32, i32) {
    %c0_i32 = arith.constant 0 : i32
    %c0_i32_0 = arith.constant 0 : i32
    %c0_i32_1 = arith.constant 0 : i32
    return %c0_i32, %c0_i32_0 : i32, i32
  }
  func.func @transform_4(%arg0: i32) -> (i32, i32, i32) {
    %c0_i32 = arith.constant 0 : i32
    %c0_i32_0 = arith.constant 0 : i32
    %c0_i32_1 = arith.constant 0 : i32
    return %arg0, %c0_i32, %c0_i32_0 : i32, i32, i32
  }
}

</mosaic_0001>

<llo_original>
// kernel: tpu_custom_call.1
$region0: #{tpu_custom_call.1}
  #allocation0 [shape = 'u32[]', space=smem, size = 0x4, offset = 0x4, fixed_abs, tag = 'smem constant byte address 0x4 - core index']
  #allocation1 [shape = 'u32[144,128]{1,0:T(1,128)}', space=vmem, size = 0x12000, scoped, tag = 'internal scratch']
  #allocation2 [shape = 'f32[8,128]{1,0:T(8,128)}', space=vmem, size = 0x1000, scoped, tag = 'scratch operand']
  %s0 = inlined_call_operand.hbm [shape: f32[2,8,16], index: 0, kind: input, shape index: {}]
  %s1 = inlined_call_operand.hbm [shape: f32[16,128], index: 1, kind: input, shape index: {}]
  %s2 = inlined_call_operand.hbm [shape: f32[32,128], index: 2, kind: input, shape index: {}]
  %s3 = inlined_call_operand.hbm [shape: f32[8,32], index: 3, kind: input, shape index: {}]
  %s4 = inlined_call_operand.hbm [shape: f32[2,1,32], index: 4, kind: output, shape index: {}]
  %s5 = sld [smem:[#allocation0]]
  $region65: #{tpu_custom_call.1} parent=0
    _
  %s7 = ssub.s32 1, %s5
  %s8 = scalar_select 0, %s7, %s5
  $region1: #{tpu_custom_call.1} parent=0
    #allocation3 [shape = 'u8[8192]{0}', space=vmem, size = 0x2000, scoped, tag = 'input window, operand 0']
    #allocation4 [shape = 's32[2]{0}', space=sflag, size = 0x8, scoped, tag = 'scoped memory for tpu_custom_call.1']
    #allocation5 [shape = 's32[2]{0}', space=sflag, size = 0x8, scoped, tag = 'scoped memory for tpu_custom_call.1']
    #allocation6 [shape = 'u8[8192]{0}', space=vmem, size = 0x2000, scoped, tag = 'input window, operand 1, single buffered']
    #allocation7 [shape = 's32[1]{0}', space=sflag, size = 0x4, scoped, tag = 'scoped memory for tpu_custom_call.1']
    #allocation8 [shape = 'u8[16384]{0}', space=vmem, size = 0x4000, scoped, tag = 'input window, operand 2, single buffered']
    #allocation9 [shape = 'u8[4096]{0}', space=vmem, size = 0x1000, scoped, tag = 'input window, operand 3, single buffered']
    #allocation10 [shape = 's32[1]{0}', space=sflag, size = 0x4, scoped, tag = 'scoped memory for tpu_custom_call.1']
    #allocation11 [shape = 'u8[1024]{0}', space=vmem, size = 0x400, scoped, tag = 'output window, operand 0']
    %9 = vsyncpa [#allocation4], 0
    %s10 = scalar_lea.sflag [#allocation4], 1
    %11 = vsyncpa %s10, 0
    %12 = vsyncpa [#allocation7], 0
    %13 = vsyncpa [#allocation10], 0
    %14 = vsyncpa [#allocation5], 0
    %s15 = scalar_lea.sflag [#allocation5], 1
    %16 = vsyncpa %s15, 0
    loop: start=0, step=1, limit=4
    $region2: #{tpu_custom_call.1} parent=1 // loop_pre_header
      _
    $region3: #{tpu_custom_call.1} parent=1 // loop_header
      %s18 = sphi 0, %s22
      %p19 = scmp.ge.s32.totalorder %s18, 4
      %s28 = sphi 0, %s30
      %s31 = sphi 0, %s28
      %s32 = sphi 0, %s31
      %s48 = sphi 0, %s32
      %s52 = sphi 0, %s52
      %s54 = sphi 0, %s52
      %s55 = sphi 0, %s54
      %s69 = sphi 0, %s55
      %s73 = sphi 0, %s73
      %s75 = sphi 0, %s73
      %s76 = sphi 0, %s75
      %s90 = sphi 0, %s76
      %s94 = sphi 0, %s94
      %s96 = sphi 0, %s94
      %s97 = sphi 0, %s96
      %s111 = sphi 0, %s97
      %s117 = sphi 0, %s119
      %s120 = sphi 0, %s117
      %s121 = sphi 0, %s120
      %s137 = sphi 0, %s121
    $region4: #{tpu_custom_call.1} parent=1 // loop_header_branch
      %21 = sbr.rel (%p19) target = $region8
    $region5: #{tpu_custom_call.1} parent=1 // loop_body
      %s23 = ssub.s32 %s18, 1
      %s24 = ssub.s32 %s18, 2
      %s25 = sadd.s32 %s18, 1
      %s26 = ssub.s32 %s18, %s25
      %p27 = scmp.eq.s32.totalorder %s26, 0
      %s29 = sadd.s32 %s28, 1
      %s30 = scalar_select %p27, %s28, %s29
      %p33 = pneg %p27
      %p34 = scmp.eq.s32.totalorder %s18, 1
      %p35 = por %p33, %p34
      %p36 = scmp.ne.s32.totalorder %s28, %s31
      %p37 = scmp.eq.s32.totalorder %s18, 0
      %p38 = por %p36, %p37
      %p39 = scmp.ne.s32.totalorder %s28, %s31
      %p40 = scmp.eq.s32.totalorder %s23, 1
      %p41 = por %p39, %p40
      %p42 = scmp.ne.s32.totalorder %s31, %s32
      %p43 = scmp.eq.s32.totalorder %s23, 0
      %p44 = por %p42, %p43
      %p45 = scmp.ne.s32.totalorder %s31, %s32
      %p46 = scmp.eq.s32.totalorder %s24, 1
      %p47 = por %p45, %p46
      %p49 = scmp.ne.s32.totalorder %s32, %s48
      %p50 = scmp.eq.s32.totalorder %s24, 0
      %p51 = por %p49, %p50
      %s53 = sadd.s32 %s52, 1
      %p56 = scmp.eq.s32.totalorder %s18, 1
      %p57 = scmp.ne.s32.totalorder %s52, %s54
      %p58 = scmp.eq.s32.totalorder %s18, 0
      %p59 = por %p57, %p58
      %p60 = scmp.ne.s32.totalorder %s52, %s54
      %p61 = scmp.eq.s32.totalorder %s23, 1
      %p62 = por %p60, %p61
      %p63 = scmp.ne.s32.totalorder %s54, %s55
      %p64 = scmp.eq.s32.totalorder %s23, 0
      %p65 = por %p63, %p64
      %p66 = scmp.ne.s32.totalorder %s54, %s55
      %p67 = scmp.eq.s32.totalorder %s24, 1
      %p68 = por %p66, %p67
      %p70 = scmp.ne.s32.totalorder %s55, %s69
      %p71 = scmp.eq.s32.totalorder %s24, 0
      %p72 = por %p70, %p71
      %s74 = sadd.s32 %s73, 1
      %p77 = scmp.eq.s32.totalorder %s18, 1
      %p78 = scmp.ne.s32.totalorder %s73, %s75
      %p79 = scmp.eq.s32.totalorder %s18, 0
      %p80 = por %p78, %p79
      %p81 = scmp.ne.s32.totalorder %s73, %s75
      %p82 = scmp.eq.s32.totalorder %s23, 1
      %p83 = por %p81, %p82
      %p84 = scmp.ne.s32.totalorder %s75, %s76
      %p85 = scmp.eq.s32.totalorder %s23, 0
      %p86 = por %p84, %p85
      %p87 = scmp.ne.s32.totalorder %s75, %s76
      %p88 = scmp.eq.s32.totalorder %s24, 1
      %p89 = por %p87, %p88
      %p91 = scmp.ne.s32.totalorder %s76, %s90
      %p92 = scmp.eq.s32.totalorder %s24, 0
      %p93 = por %p91, %p92
      %s95 = sadd.s32 %s94, 1
      %p98 = scmp.eq.s32.totalorder %s18, 1
      %p99 = scmp.ne.s32.totalorder %s94, %s96
      %p100 = scmp.eq.s32.totalorder %s18, 0
      %p101 = por %p99, %p100
      %p102 = scmp.ne.s32.totalorder %s94, %s96
      %p103 = scmp.eq.s32.totalorder %s23, 1
      %p104 = por %p102, %p103
      %p105 = scmp.ne.s32.totalorder %s96, %s97
      %p106 = scmp.eq.s32.totalorder %s23, 0
      %p107 = por %p105, %p106
      %p108 = scmp.ne.s32.totalorder %s96, %s97
      %p109 = scmp.eq.s32.totalorder %s24, 1
      %p110 = por %p108, %p109
      %p112 = scmp.ne.s32.totalorder %s97, %s111
      %p113 = scmp.eq.s32.totalorder %s24, 0
      %p114 = por %p112, %p113
      %s115 = ssub.s32 %s18, %s25
      %p116 = scmp.eq.s32.totalorder %s115, 0
      %s118 = sadd.s32 %s117, 1
      %s119 = scalar_select %p116, %s117, %s118
      %p122 = pneg %p116
      %p123 = scmp.eq.s32.totalorder %s18, 1
      %p124 = por %p122, %p123
      %p125 = scmp.ne.s32.totalorder %s117, %s120
      %p126 = scmp.eq.s32.totalorder %s18, 0
      %p127 = por %p125, %p126
      %p128 = scmp.ne.s32.totalorder %s117, %s120
      %p129 = scmp.eq.s32.totalorder %s23, 1
      %p130 = por %p128, %p129
      %p131 = scmp.ne.s32.totalorder %s120, %s121
      %p132 = scmp.eq.s32.totalorder %s23, 0
      %p133 = por %p131, %p132
      %p134 = scmp.ne.s32.totalorder %s120, %s121
      %p135 = scmp.eq.s32.totalorder %s24, 1
      %p136 = por %p134, %p135
      %p138 = scmp.ne.s32.totalorder %s121, %s137
      %p139 = scmp.eq.s32.totalorder %s24, 0
      %p140 = por %p138, %p139
      %p141 = scmp.le.s32.totalorder 1, %s18
      %p142 = scmp.lt.s32.totalorder %s18, 3
      %p143 = pnand %p141, %p142
      %p144 = pneg %p143
      // Predicated region
      $region9: #{tpu_custom_call.1} parent=5 // pred_check
        _
      $region10: #{tpu_custom_call.1} parent=5 // pred_check_branch
        %146 = sbr.rel (%p143) target = $region12
      $region11: #{tpu_custom_call.1} parent=5 // pred_region
        %s147 = ssub.s32 %s18, 1
        // Predicated region
        $region13: #{tpu_custom_call.1} parent=11 // pred_check
          %p148 = pneg %p65
        $region14: #{tpu_custom_call.1} parent=11 // pred_check_branch
          %150 = sbr.rel (%p148) target = $region16
        $region15: #{tpu_custom_call.1} parent=11 // pred_region
          %s152 = ssub.s32 256, 256
          %153 = vsyncadd [#allocation7], %s152
          %s154 = sshll.u32 [#allocation6], 4
          %s155 = int_to_ptr.vmem [resolvable:$true] %s154
          %160 = dma.hbm_to_vmem [thread:$0]  %s1, 256, %s155, [#allocation7], 128, 128, 8
        $region16: #{tpu_custom_call.1} parent=11 // pred_fallthru
          _
        // Predicated region
        $region17: #{tpu_custom_call.1} parent=11 // pred_check
          %p161 = pneg %p86
        $region18: #{tpu_custom_call.1} parent=11 // pred_check_branch
          %163 = sbr.rel (%p161) target = $region20
        $region19: #{tpu_custom_call.1} parent=11 // pred_region
          %s165 = ssub.s32 512, 512
          %166 = vsyncadd [#allocation7], %s165
          %s167 = sshll.u32 [#allocation8], 4
          %s168 = int_to_ptr.vmem [resolvable:$true] %s167
          %173 = dma.hbm_to_vmem [thread:$0]  %s2, 512, %s168, [#allocation7], 128, 128, 8
        $region20: #{tpu_custom_call.1} parent=11 // pred_fallthru
          _
        // Predicated region
        $region21: #{tpu_custom_call.1} parent=11 // pred_check
          %p174 = pneg %p107
        $region22: #{tpu_custom_call.1} parent=11 // pred_check_branch
          %176 = sbr.rel (%p174) target = $region24
        $region23: #{tpu_custom_call.1} parent=11 // pred_region
          %s178 = ssub.s32 128, 128
          %179 = vsyncadd [#allocation10], %s178
          %s181 = sshll.u32 [#allocation9], 4
          %s182 = int_to_ptr.vmem [resolvable:$true] %s181
          %184 = dma.hbm_to_vmem [thread:$0]  %s3, 128, %s182, [#allocation10]
        $region24: #{tpu_custom_call.1} parent=11 // pred_fallthru
          _
      $region12: #{tpu_custom_call.1} parent=5 // pred_fallthru
        _
      %p185 = scmp.lt.s32.totalorder %s18, 2
      // Predicated region
      $region25: #{tpu_custom_call.1} parent=5 // pred_check
        %p186 = pneg %p185
      $region26: #{tpu_custom_call.1} parent=5 // pred_check_branch
        %188 = sbr.rel (%p186) target = $region28
      $region27: #{tpu_custom_call.1} parent=5 // pred_region
        // Predicated region
        $region29: #{tpu_custom_call.1} parent=27 // pred_check
          %p189 = pneg %p38
        $region30: #{tpu_custom_call.1} parent=27 // pred_check_branch
          %191 = sbr.rel (%p189) target = $region32
        $region31: #{tpu_custom_call.1} parent=27 // pred_region
          %s192 = sand.u32 %s28, 1
          %s193 = scalar_lea.sflag [#allocation4], %s192
          %s194 = sand.u32 %s28, 1
          %s195 = smul.addr %s194, 8
          %s196 = scalar_lea.vmem [#allocation3], %s195
          %s198 = ssub.s32 128, 128
          %199 = vsyncadd %s193, %s198
          %s200 = smul.addr %s18, 128
          %s201 = scalar_lea.hbm %s0, %s200
          %s203 = sshll.u32 %s196, 4
          %s204 = int_to_ptr.vmem [resolvable:$true] %s203
          %206 = dma.hbm_to_vmem [thread:$0]  %s201, 128, %s204, %s193
        $region32: #{tpu_custom_call.1} parent=27 // pred_fallthru
          _
      $region28: #{tpu_custom_call.1} parent=5 // pred_fallthru
        _
      %p207 = scmp.le.s32.totalorder 1, %s18
      %p208 = scmp.lt.s32.totalorder %s18, 3
      %p209 = pnand %p207, %p208
      %p210 = pneg %p209
      // Predicated region
      $region33: #{tpu_custom_call.1} parent=5 // pred_check
        _
      $region34: #{tpu_custom_call.1} parent=5 // pred_check_branch
        %212 = sbr.rel (%p209) target = $region36
      $region35: #{tpu_custom_call.1} parent=5 // pred_region
        %s213 = ssub.s32 %s18, 1
        %s214 = sand.u32 %s31, 1
        %s215 = scalar_lea.sflag [#allocation4], %s214
        %s216 = sand.u32 %s31, 1
        %s217 = smul.addr %s216, 8
        %s218 = scalar_lea.vmem [#allocation3], %s217
        // Predicated region
        $region37: #{tpu_custom_call.1} parent=35 // pred_check
          %p219 = pneg %p44
        $region38: #{tpu_custom_call.1} parent=35 // pred_check_branch
          %221 = sbr.rel (%p219) target = $region40
        $region39: #{tpu_custom_call.1} parent=35 // pred_region
          %222 = dma.done %s215, 128
        $region40: #{tpu_custom_call.1} parent=35 // pred_fallthru
          _
        // Predicated region
        $region41: #{tpu_custom_call.1} parent=35 // pred_check
          %p223 = pneg %p65
        $region42: #{tpu_custom_call.1} parent=35 // pred_check_branch
          %225 = sbr.rel (%p223) target = $region44
        $region43: #{tpu_custom_call.1} parent=35 // pred_region
          %226 = dma.done [#allocation7], 256
        $region44: #{tpu_custom_call.1} parent=35 // pred_fallthru
          _
        // Predicated region
        $region45: #{tpu_custom_call.1} parent=35 // pred_check
          %p227 = pneg %p86
        $region46: #{tpu_custom_call.1} parent=35 // pred_check_branch
          %229 = sbr.rel (%p227) target = $region48
        $region47: #{tpu_custom_call.1} parent=35 // pred_region
          %230 = dma.done [#allocation7], 512
        $region48: #{tpu_custom_call.1} parent=35 // pred_fallthru
          _
        // Predicated region
        $region49: #{tpu_custom_call.1} parent=35 // pred_check
          %p231 = pneg %p107
        $region50: #{tpu_custom_call.1} parent=35 // pred_check_branch
          %233 = sbr.rel (%p231) target = $region52
        $region51: #{tpu_custom_call.1} parent=35 // pred_region
          %234 = dma.done [#allocation10], 128
        $region52: #{tpu_custom_call.1} parent=35 // pred_fallthru
          _
        %s235 = sand.u32 %s31, 1
        %s236 = scalar_lea.sflag [#allocation4], %s235
        %s237 = sand.u32 %s31, 1
        %s238 = smul.addr %s237, 8
        %s239 = scalar_lea.vmem [#allocation3], %s238
        %p240 = pneg %p44
        %p241 = pneg %p41
        %p242 = pneg %p65
        %p243 = pneg %p62
        %p244 = pneg %p86
        %p245 = pneg %p83
        %p246 = pneg %p107
        %p247 = pneg %p104
        %p248 = pneg %p133
        %p249 = pneg %p130
        %s250 = sand.u32 %s120, 1
        %s251 = scalar_lea.sflag [#allocation5], %s250
        %s252 = sand.u32 %s120, 1
        %s253 = scalar_lea.vmem [#allocation11], %s252
        %v254 = vld [vmem:[%s218] sm:$0xff]
        %v255 = vld [vmem:[#allocation6] sm:$0xff]
        %v256 = vld [vmem:[#allocation6 + $0x8] sm:$0xff]
        %vm257 = vcmask 130048
        %v259 = vsel %vm257, %v254, 0
        %261 = vmatprep.subr.mxu0 0.0
        %262 = vmatpush1.msra.mxu0 0.0
        %263 = vmatprep.subr.mxu0 0.0
        %264 = vmatpush1.msra.mxu0 0.0
        %265 = vmatprep.subr.mxu0 0.0
        %266 = vmatpush1.msra.mxu0 0.0
        %267 = vmatprep.subr.mxu0 0.0
        %268 = vmatpush1.msra.mxu0 0.0
        %269 = vmatprep.subr.mxu0 0.0
        %270 = vmatpush1.msra.mxu0 0.0
        %271 = vmatprep.subr.mxu0 0.0
        %272 = vmatpush1.msra.mxu0 0.0
        %273 = vmatprep.subr.mxu0 0.0
        %274 = vmatpush1.msra.mxu0 0.0
        %275 = vmatprep.subr.mxu0 0.0
        %276 = vmatpush1.msra.mxu0 0.0
        %277 = vmatprep.subr.mxu0 0.0
        %278 = vmatpush1.msra.mxu0 0.0
        %279 = vmatprep.subr.mxu0 0.0
        %280 = vmatpush1.msra.mxu0 0.0
        %281 = vmatprep.subr.mxu0 0.0
        %282 = vmatpush1.msra.mxu0 0.0
        %283 = vmatprep.subr.mxu0 0.0
        %284 = vmatpush1.msra.mxu0 0.0
        %285 = vmatprep.subr.mxu0 0.0
        %286 = vmatpush1.msra.mxu0 0.0
        %287 = vmatprep.subr.mxu0 0.0
        %288 = vmatpush1.msra.mxu0 0.0
        %289 = vmatprep.subr.mxu0 0.0
        %290 = vmatpush1.msra.mxu0 %v256
        %291 = vmatprep.subr.mxu0 0.0
        %292 = vmatpush1.msra.mxu0 %v255
        %293 = vmatprep.subr.mxu0 0.0
        %294 = vmatpush2.msra.mxu0 0.0
        %295 = vmatprep.subr.mxu0 0.0
        %296 = vmatpush2.msra.mxu0 0.0
        %297 = vmatprep.subr.mxu0 0.0
        %298 = vmatpush2.msra.mxu0 0.0
        %299 = vmatprep.subr.mxu0 0.0
        %300 = vmatpush2.msra.mxu0 0.0
        %301 = vmatprep.subr.mxu0 0.0
        %302 = vmatpush2.msra.mxu0 0.0
        %303 = vmatprep.subr.mxu0 0.0
        %304 = vmatpush2.msra.mxu0 0.0
        %305 = vmatprep.subr.mxu0 0.0
        %306 = vmatpush2.msra.mxu0 0.0
        %307 = vmatprep.subr.mxu0 0.0
        %308 = vmatpush2.msra.mxu0 0.0
        %309 = vmatprep.subr.mxu0 0.0
        %310 = vmatpush2.msra.mxu0 0.0
        %311 = vmatprep.subr.mxu0 0.0
        %312 = vmatpush2.msra.mxu0 0.0
        %313 = vmatprep.subr.mxu0 0.0
        %314 = vmatpush2.msra.mxu0 0.0
        %315 = vmatprep.subr.mxu0 0.0
        %316 = vmatpush2.msra.mxu0 0.0
        %317 = vmatprep.subr.mxu0 0.0
        %318 = vmatpush2.msra.mxu0 0.0
        %319 = vmatprep.subr.mxu0 0.0
        %320 = vmatpush2.msra.mxu0 0.0
        %321 = vmatprep.subr.mxu0 0.0
        %322 = vmatpush2.msra.mxu0 0.0
        %323 = vmatprep.subr.mxu0 0.0
        %324 = vmatpush2.msra.mxu0 0.0
        %325 = vmatprep.mubr.f32.mxu0 0.0
        %326 = vmatmul.mubr.f32.gmra.mxu0 %v259
        %v327 = vpop.f32.mrf.mxu0
        %v328 = vadd.f32 0.0, %v327
        %v329 = vpop.f32.mrf.mxu0
        %330 = vdwg.mxu0
        %331 = vst [vmem:[#allocation2] sm:$0xff] %v328
        %v332 = vld [vmem:[#allocation8] sm:$0xff]
        %v333 = vld [vmem:[#allocation8 + $0x8] sm:$0xff]
        %v334 = vld [vmem:[#allocation8 + $0x10] sm:$0xff]
        %v335 = vld [vmem:[#allocation8 + $0x18] sm:$0xff]
        %v336 = vld [vmem:[#allocation2] sm:$0x1]
        %vm337 = vcmask 261120
        %v339 = vsel %vm337, 0.0, 0
        %341 = vmatprep.subr.mxu0 0.0
        %342 = vmatpush1.msra.mxu0 0.0
        %343 = vmatprep.subr.mxu0 0.0
        %344 = vmatpush1.msra.mxu0 0.0
        %345 = vmatprep.subr.mxu0 0.0
        %346 = vmatpush1.msra.mxu0 0.0
        %347 = vmatprep.subr.mxu0 0.0
        %348 = vmatpush1.msra.mxu0 0.0
        %349 = vmatprep.subr.mxu0 0.0
        %350 = vmatpush1.msra.mxu0 0.0
        %351 = vmatprep.subr.mxu0 0.0
        %352 = vmatpush1.msra.mxu0 0.0
        %353 = vmatprep.subr.mxu0 0.0
        %354 = vmatpush1.msra.mxu0 0.0
        %355 = vmatprep.subr.mxu0 0.0
        %356 = vmatpush1.msra.mxu0 0.0
        %357 = vmatprep.subr.mxu0 0.0
        %358 = vmatpush1.msra.mxu0 0.0
        %359 = vmatprep.subr.mxu0 0.0
        %360 = vmatpush1.msra.mxu0 0.0
        %361 = vmatprep.subr.mxu0 0.0
        %362 = vmatpush1.msra.mxu0 0.0
        %363 = vmatprep.subr.mxu0 0.0
        %364 = vmatpush1.msra.mxu0 0.0
        %365 = vmatprep.subr.mxu0 0.0
        %366 = vmatpush1.msra.mxu0 %v335
        %367 = vmatprep.subr.mxu0 0.0
        %368 = vmatpush1.msra.mxu0 %v334
        %369 = vmatprep.subr.mxu0 0.0
        %370 = vmatpush1.msra.mxu0 %v333
        %371 = vmatprep.subr.mxu0 0.0
        %372 = vmatpush1.msra.mxu0 %v332
        %373 = vmatprep.subr.mxu0 0.0
        %374 = vmatpush2.msra.mxu0 0.0
        %375 = vmatprep.subr.mxu0 0.0
        %376 = vmatpush2.msra.mxu0 0.0
        %377 = vmatprep.subr.mxu0 0.0
        %378 = vmatpush2.msra.mxu0 0.0
        %379 = vmatprep.subr.mxu0 0.0
        %380 = vmatpush2.msra.mxu0 0.0
        %381 = vmatprep.subr.mxu0 0.0
        %382 = vmatpush2.msra.mxu0 0.0
        %383 = vmatprep.subr.mxu0 0.0
        %384 = vmatpush2.msra.mxu0 0.0
        %385 = vmatprep.subr.mxu0 0.0
        %386 = vmatpush2.msra.mxu0 0.0
        %387 = vmatprep.subr.mxu0 0.0
        %388 = vmatpush2.msra.mxu0 0.0
        %389 = vmatprep.subr.mxu0 0.0
        %390 = vmatpush2.msra.mxu0 0.0
        %391 = vmatprep.subr.mxu0 0.0
        %392 = vmatpush2.msra.mxu0 0.0
        %393 = vmatprep.subr.mxu0 0.0
        %394 = vmatpush2.msra.mxu0 0.0
        %395 = vmatprep.subr.mxu0 0.0
        %396 = vmatpush2.msra.mxu0 0.0
        %397 = vmatprep.subr.mxu0 0.0
        %398 = vmatpush2.msra.mxu0 0.0
        %399 = vmatprep.subr.mxu0 0.0
        %400 = vmatpush2.msra.mxu0 0.0
        %401 = vmatprep.subr.mxu0 0.0
        %402 = vmatpush2.msra.mxu0 0.0
        %403 = vmatprep.subr.mxu0 0.0
        %404 = vmatpush2.msra.mxu0 0.0
        %405 = vmatprep.mubr.f32.mxu0 0.0
        %406 = vmatmul.mubr.f32.gmra.mxu0 %v339
        %v407 = vpop.f32.mrf.mxu0
        %v408 = vadd.f32 0.0, %v407
        %v409 = vpop.f32.mrf.mxu0
        %410 = vdwg.mxu0
        %v411 = vadd.f32 %v336, %v408
        %v412 = vxor.u32 %v411, 2147483648
        %v413 = vmul.f32 %v412, 1.442695
        %v414 = vpow.pop %v413
        %v415 = vadd.f32 %v414, 1.0
        %v416 = vrcp.pop %v415
        %v417 = vmul.f32 1.0, %v416
        %v418 = vtanh.pop %v411
        %v419 = vmul.f32 %v417, 0.0
        %421 = vrot.lane.b32.xlu0 %v418, 64
        %v422 = vpop.permute.xlu0 %421
        %v424 = vmul.f32 %v417, %v422
        %426 = vrot.lane.b32.xlu0 %v424, 32
        %v427 = vpop.permute.xlu0 %426
        %v429 = vadd.f32 %v419, %v427
        %v430 = vtanh.pop %v429
        %432 = vrot.lane.b32.xlu0 %v430, 64
        %v433 = vpop.permute.xlu0 %432
        %v435 = vmul.f32 %v417, %v433
        %v436 = vld [vmem:[#allocation2 + $0x1] sm:$0x1]
        %438 = vrot.lane.b32.xlu0 %v435, 32
        %v439 = vpop.permute.xlu0 %438
        %v440 = vsel %vm337, %v439, 0
        %442 = vmatprep.subr.mxu0 0.0
        %443 = vmatpush1.msra.mxu0 0.0
        %444 = vmatprep.subr.mxu0 0.0
        %445 = vmatpush1.msra.mxu0 0.0
        %446 = vmatprep.subr.mxu0 0.0
        %447 = vmatpush1.msra.mxu0 0.0
        %448 = vmatprep.subr.mxu0 0.0
        %449 = vmatpush1.msra.mxu0 0.0
        %450 = vmatprep.subr.mxu0 0.0
        %451 = vmatpush1.msra.mxu0 0.0
        %452 = vmatprep.subr.mxu0 0.0
        %453 = vmatpush1.msra.mxu0 0.0
        %454 = vmatprep.subr.mxu0 0.0
        %455 = vmatpush1.msra.mxu0 0.0
        %456 = vmatprep.subr.mxu0 0.0
        %457 = vmatpush1.msra.mxu0 0.0
        %458 = vmatprep.subr.mxu0 0.0
        %459 = vmatpush1.msra.mxu0 0.0
        %460 = vmatprep.subr.mxu0 0.0
        %461 = vmatpush1.msra.mxu0 0.0
        %462 = vmatprep.subr.mxu0 0.0
        %463 = vmatpush1.msra.mxu0 0.0
        %464 = vmatprep.subr.mxu0 0.0
        %465 = vmatpush1.msra.mxu0 0.0
        %466 = vmatprep.subr.mxu0 0.0
        %467 = vmatpush1.msra.mxu0 %v335
        %468 = vmatprep.subr.mxu0 0.0
        %469 = vmatpush1.msra.mxu0 %v334
        %470 = vmatprep.subr.mxu0 0.0
        %471 = vmatpush1.msra.mxu0 %v333
        %472 = vmatprep.subr.mxu0 0.0
        %473 = vmatpush1.msra.mxu0 %v332
        %474 = vmatprep.subr.mxu0 0.0
        %475 = vmatpush2.msra.mxu0 0.0
        %476 = vmatprep.subr.mxu0 0.0
        %477 = vmatpush2.msra.mxu0 0.0
        %478 = vmatprep.subr.mxu0 0.0
        %479 = vmatpush2.msra.mxu0 0.0
        %480 = vmatprep.subr.mxu0 0.0
        %481 = vmatpush2.msra.mxu0 0.0
        %482 = vmatprep.subr.mxu0 0.0
        %483 = vmatpush2.msra.mxu0 0.0
        %484 = vmatprep.subr.mxu0 0.0
        %485 = vmatpush2.msra.mxu0 0.0
        %486 = vmatprep.subr.mxu0 0.0
        %487 = vmatpush2.msra.mxu0 0.0
        %488 = vmatprep.subr.mxu0 0.0
        %489 = vmatpush2.msra.mxu0 0.0
        %490 = vmatprep.subr.mxu0 0.0
        %491 = vmatpush2.msra.mxu0 0.0
        %492 = vmatprep.subr.mxu0 0.0
        %493 = vmatpush2.msra.mxu0 0.0
        %494 = vmatprep.subr.mxu0 0.0
        %495 = vmatpush2.msra.mxu0 0.0
        %496 = vmatprep.subr.mxu0 0.0
        %497 = vmatpush2.msra.mxu0 0.0
        %498 = vmatprep.subr.mxu0 0.0
        %499 = vmatpush2.msra.mxu0 0.0
        %500 = vmatprep.subr.mxu0 0.0
        %501 = vmatpush2.msra.mxu0 0.0
        %502 = vmatprep.subr.mxu0 0.0
        %503 = vmatpush2.msra.mxu0 0.0
        %504 = vmatprep.subr.mxu0 0.0
        %505 = vmatpush2.msra.mxu0 0.0
        %506 = vmatprep.mubr.f32.mxu0 0.0
        %507 = vmatmul.mubr.f32.gmra.mxu0 %v440
        %v508 = vpop.f32.mrf.mxu0
        %v509 = vadd.f32 0.0, %v508
        %v510 = vpop.f32.mrf.mxu0
        %511 = vdwg.mxu0
        %v512 = vadd.f32 %v436, %v509
        %v513 = vxor.u32 %v512, 2147483648
        %v514 = vmul.f32 %v513, 1.442695
        %v515 = vpow.pop %v514
        %v516 = vadd.f32 %v515, 1.0
        %v517 = vrcp.pop %v516
        %v518 = vmul.f32 1.0, %v517
        %v519 = vtanh.pop %v512
        %v520 = vmul.f32 %v518, %v429
        %522 = vrot.lane.b32.xlu0 %v519, 64
        %v523 = vpop.permute.xlu0 %522
        %v525 = vmul.f32 %v518, %v523
        %527 = vrot.lane.b32.xlu0 %v525, 32
        %v528 = vpop.permute.xlu0 %527
        %v530 = vadd.f32 %v520, %v528
        %v531 = vtanh.pop %v530
        %533 = vrot.lane.b32.xlu0 %v531, 64
        %v534 = vpop.permute.xlu0 %533
        %v536 = vmul.f32 %v518, %v534
        %v537 = vld [vmem:[#allocation2 + $0x2] sm:$0x1]
        %539 = vrot.lane.b32.xlu0 %v536, 32
        %v540 = vpop.permute.xlu0 %539
        %v541 = vsel %vm337, %v540, 0
        %543 = vmatprep.subr.mxu0 0.0
        %544 = vmatpush1.msra.mxu0 0.0
        %545 = vmatprep.subr.mxu0 0.0
        %546 = vmatpush1.msra.mxu0 0.0
        %547 = vmatprep.subr.mxu0 0.0
        %548 = vmatpush1.msra.mxu0 0.0
        %549 = vmatprep.subr.mxu0 0.0
        %550 = vmatpush1.msra.mxu0 0.0
        %551 = vmatprep.subr.mxu0 0.0
        %552 = vmatpush1.msra.mxu0 0.0
        %553 = vmatprep.subr.mxu0 0.0
        %554 = vmatpush1.msra.mxu0 0.0
        %555 = vmatprep.subr.mxu0 0.0
        %556 = vmatpush1.msra.mxu0 0.0
        %557 = vmatprep.subr.mxu0 0.0
        %558 = vmatpush1.msra.mxu0 0.0
        %559 = vmatprep.subr.mxu0 0.0
        %560 = vmatpush1.msra.mxu0 0.0
        %561 = vmatprep.subr.mxu0 0.0
        %562 = vmatpush1.msra.mxu0 0.0
        %563 = vmatprep.subr.mxu0 0.0
        %564 = vmatpush1.msra.mxu0 0.0
        %565 = vmatprep.subr.mxu0 0.0
        %566 = vmatpush1.msra.mxu0 0.0
        %567 = vmatprep.subr.mxu0 0.0
        %568 = vmatpush1.msra.mxu0 %v335
        %569 = vmatprep.subr.mxu0 0.0
        %570 = vmatpush1.msra.mxu0 %v334
        %571 = vmatprep.subr.mxu0 0.0
        %572 = vmatpush1.msra.mxu0 %v333
        %573 = vmatprep.subr.mxu0 0.0
        %574 = vmatpush1.msra.mxu0 %v332
        %575 = vmatprep.subr.mxu0 0.0
        %576 = vmatpush2.msra.mxu0 0.0
        %577 = vmatprep.subr.mxu0 0.0
        %578 = vmatpush2.msra.mxu0 0.0
        %579 = vmatprep.subr.mxu0 0.0
        %580 = vmatpush2.msra.mxu0 0.0
        %581 = vmatprep.subr.mxu0 0.0
        %582 = vmatpush2.msra.mxu0 0.0
        %583 = vmatprep.subr.mxu0 0.0
        %584 = vmatpush2.msra.mxu0 0.0
        %585 = vmatprep.subr.mxu0 0.0
        %586 = vmatpush2.msra.mxu0 0.0
        %587 = vmatprep.subr.mxu0 0.0
        %588 = vmatpush2.msra.mxu0 0.0
        %589 = vmatprep.subr.mxu0 0.0
        %590 = vmatpush2.msra.mxu0 0.0
        %591 = vmatprep.subr.mxu0 0.0
        %592 = vmatpush2.msra.mxu0 0.0
        %593 = vmatprep.subr.mxu0 0.0
        %594 = vmatpush2.msra.mxu0 0.0
        %595 = vmatprep.subr.mxu0 0.0
        %596 = vmatpush2.msra.mxu0 0.0
        %597 = vmatprep.subr.mxu0 0.0
        %598 = vmatpush2.msra.mxu0 0.0
        %599 = vmatprep.subr.mxu0 0.0
        %600 = vmatpush2.msra.mxu0 0.0
        %601 = vmatprep.subr.mxu0 0.0
        %602 = vmatpush2.msra.mxu0 0.0
        %603 = vmatprep.subr.mxu0 0.0
        %604 = vmatpush2.msra.mxu0 0.0
        %605 = vmatprep.subr.mxu0 0.0
        %606 = vmatpush2.msra.mxu0 0.0
        %607 = vmatprep.mubr.f32.mxu0 0.0
        %608 = vmatmul.mubr.f32.gmra.mxu0 %v541
        %v609 = vpop.f32.mrf.mxu0
        %v610 = vadd.f32 0.0, %v609
        %v611 = vpop.f32.mrf.mxu0
        %612 = vdwg.mxu0
        %v613 = vadd.f32 %v537, %v610
        %v614 = vxor.u32 %v613, 2147483648
        %v615 = vmul.f32 %v614, 1.442695
        %v616 = vpow.pop %v615
        %v617 = vadd.f32 %v616, 1.0
        %v618 = vrcp.pop %v617
        %v619 = vmul.f32 1.0, %v618
        %v620 = vtanh.pop %v613
        %v621 = vmul.f32 %v619, %v530
        %623 = vrot.lane.b32.xlu0 %v620, 64
        %v624 = vpop.permute.xlu0 %623
        %v626 = vmul.f32 %v619, %v624
        %628 = vrot.lane.b32.xlu0 %v626, 32
        %v629 = vpop.permute.xlu0 %628
        %v631 = vadd.f32 %v621, %v629
        %v632 = vtanh.pop %v631
        %634 = vrot.lane.b32.xlu0 %v632, 64
        %v635 = vpop.permute.xlu0 %634
        %v637 = vmul.f32 %v619, %v635
        %v638 = vld [vmem:[#allocation2 + $0x3] sm:$0x1]
        %640 = vrot.lane.b32.xlu0 %v637, 32
        %v641 = vpop.permute.xlu0 %640
        %v642 = vsel %vm337, %v641, 0
        %644 = vmatprep.subr.mxu0 0.0
        %645 = vmatpush1.msra.mxu0 0.0
        %646 = vmatprep.subr.mxu0 0.0
        %647 = vmatpush1.msra.mxu0 0.0
        %648 = vmatprep.subr.mxu0 0.0
        %649 = vmatpush1.msra.mxu0 0.0
        %650 = vmatprep.subr.mxu0 0.0
        %651 = vmatpush1.msra.mxu0 0.0
        %652 = vmatprep.subr.mxu0 0.0
        %653 = vmatpush1.msra.mxu0 0.0
        %654 = vmatprep.subr.mxu0 0.0
        %655 = vmatpush1.msra.mxu0 0.0
        %656 = vmatprep.subr.mxu0 0.0
        %657 = vmatpush1.msra.mxu0 0.0
        %658 = vmatprep.subr.mxu0 0.0
        %659 = vmatpush1.msra.mxu0 0.0
        %660 = vmatprep.subr.mxu0 0.0
        %661 = vmatpush1.msra.mxu0 0.0
        %662 = vmatprep.subr.mxu0 0.0
        %663 = vmatpush1.msra.mxu0 0.0
        %664 = vmatprep.subr.mxu0 0.0
        %665 = vmatpush1.msra.mxu0 0.0
        %666 = vmatprep.subr.mxu0 0.0
        %667 = vmatpush1.msra.mxu0 0.0
        %668 = vmatprep.subr.mxu0 0.0
        %669 = vmatpush1.msra.mxu0 %v335
        %670 = vmatprep.subr.mxu0 0.0
        %671 = vmatpush1.msra.mxu0 %v334
        %672 = vmatprep.subr.mxu0 0.0
        %673 = vmatpush1.msra.mxu0 %v333
        %674 = vmatprep.subr.mxu0 0.0
        %675 = vmatpush1.msra.mxu0 %v332
        %676 = vmatprep.subr.mxu0 0.0
        %677 = vmatpush2.msra.mxu0 0.0
        %678 = vmatprep.subr.mxu0 0.0
        %679 = vmatpush2.msra.mxu0 0.0
        %680 = vmatprep.subr.mxu0 0.0
        %681 = vmatpush2.msra.mxu0 0.0
        %682 = vmatprep.subr.mxu0 0.0
        %683 = vmatpush2.msra.mxu0 0.0
        %684 = vmatprep.subr.mxu0 0.0
        %685 = vmatpush2.msra.mxu0 0.0
        %686 = vmatprep.subr.mxu0 0.0
        %687 = vmatpush2.msra.mxu0 0.0
        %688 = vmatprep.subr.mxu0 0.0
        %689 = vmatpush2.msra.mxu0 0.0
        %690 = vmatprep.subr.mxu0 0.0
        %691 = vmatpush2.msra.mxu0 0.0
        %692 = vmatprep.subr.mxu0 0.0
        %693 = vmatpush2.msra.mxu0 0.0
        %694 = vmatprep.subr.mxu0 0.0
        %695 = vmatpush2.msra.mxu0 0.0
        %696 = vmatprep.subr.mxu0 0.0
        %697 = vmatpush2.msra.mxu0 0.0
        %698 = vmatprep.subr.mxu0 0.0
        %699 = vmatpush2.msra.mxu0 0.0
        %700 = vmatprep.subr.mxu0 0.0
        %701 = vmatpush2.msra.mxu0 0.0
        %702 = vmatprep.subr.mxu0 0.0
        %703 = vmatpush2.msra.mxu0 0.0
        %704 = vmatprep.subr.mxu0 0.0
        %705 = vmatpush2.msra.mxu0 0.0
        %706 = vmatprep.subr.mxu0 0.0
        %707 = vmatpush2.msra.mxu0 0.0
        %708 = vmatprep.mubr.f32.mxu0 0.0
        %709 = vmatmul.mubr.f32.gmra.mxu0 %v642
        %v710 = vpop.f32.mrf.mxu0
        %v711 = vadd.f32 0.0, %v710
        %v712 = vpop.f32.mrf.mxu0
        %713 = vdwg.mxu0
        %v714 = vadd.f32 %v638, %v711
        %v715 = vxor.u32 %v714, 2147483648
        %v716 = vmul.f32 %v715, 1.442695
        %v717 = vpow.pop %v716
        %v718 = vadd.f32 %v717, 1.0
        %v719 = vrcp.pop %v718
        %v720 = vmul.f32 1.0, %v719
        %v721 = vtanh.pop %v714
        %v722 = vmul.f32 %v720, %v631
        %724 = vrot.lane.b32.xlu0 %v721, 64
        %v725 = vpop.permute.xlu0 %724
        %v727 = vmul.f32 %v720, %v725
        %729 = vrot.lane.b32.xlu0 %v727, 32
        %v730 = vpop.permute.xlu0 %729
        %v732 = vadd.f32 %v722, %v730
        %v733 = vtanh.pop %v732
        %735 = vrot.lane.b32.xlu0 %v733, 64
        %v736 = vpop.permute.xlu0 %735
        %v738 = vmul.f32 %v720, %v736
        %v739 = vld [vmem:[#allocation2 + $0x4] sm:$0x1]
        %741 = vrot.lane.b32.xlu0 %v738, 32
        %v742 = vpop.permute.xlu0 %741
        %v743 = vsel %vm337, %v742, 0
        %745 = vmatprep.subr.mxu0 0.0
        %746 = vmatpush1.msra.mxu0 0.0
        %747 = vmatprep.subr.mxu0 0.0
        %748 = vmatpush1.msra.mxu0 0.0
        %749 = vmatprep.subr.mxu0 0.0
        %750 = vmatpush1.msra.mxu0 0.0
        %751 = vmatprep.subr.mxu0 0.0
        %752 = vmatpush1.msra.mxu0 0.0
        %753 = vmatprep.subr.mxu0 0.0
        %754 = vmatpush1.msra.mxu0 0.0
        %755 = vmatprep.subr.mxu0 0.0
        %756 = vmatpush1.msra.mxu0 0.0
        %757 = vmatprep.subr.mxu0 0.0
        %758 = vmatpush1.msra.mxu0 0.0
        %759 = vmatprep.subr.mxu0 0.0
        %760 = vmatpush1.msra.mxu0 0.0
        %761 = vmatprep.subr.mxu0 0.0
        %762 = vmatpush1.msra.mxu0 0.0
        %763 = vmatprep.subr.mxu0 0.0
        %764 = vmatpush1.msra.mxu0 0.0
        %765 = vmatprep.subr.mxu0 0.0
        %766 = vmatpush1.msra.mxu0 0.0
        %767 = vmatprep.subr.mxu0 0.0
        %768 = vmatpush1.msra.mxu0 0.0
        %769 = vmatprep.subr.mxu0 0.0
        %770 = vmatpush1.msra.mxu0 %v335
        %771 = vmatprep.subr.mxu0 0.0
        %772 = vmatpush1.msra.mxu0 %v334
        %773 = vmatprep.subr.mxu0 0.0
        %774 = vmatpush1.msra.mxu0 %v333
        %775 = vmatprep.subr.mxu0 0.0
        %776 = vmatpush1.msra.mxu0 %v332
        %777 = vmatprep.subr.mxu0 0.0
        %778 = vmatpush2.msra.mxu0 0.0
        %779 = vmatprep.subr.mxu0 0.0
        %780 = vmatpush2.msra.mxu0 0.0
        %781 = vmatprep.subr.mxu0 0.0
        %782 = vmatpush2.msra.mxu0 0.0
        %783 = vmatprep.subr.mxu0 0.0
        %784 = vmatpush2.msra.mxu0 0.0
        %785 = vmatprep.subr.mxu0 0.0
        %786 = vmatpush2.msra.mxu0 0.0
        %787 = vmatprep.subr.mxu0 0.0
        %788 = vmatpush2.msra.mxu0 0.0
        %789 = vmatprep.subr.mxu0 0.0
        %790 = vmatpush2.msra.mxu0 0.0
        %791 = vmatprep.subr.mxu0 0.0
        %792 = vmatpush2.msra.mxu0 0.0
        %793 = vmatprep.subr.mxu0 0.0
        %794 = vmatpush2.msra.mxu0 0.0
        %795 = vmatprep.subr.mxu0 0.0
        %796 = vmatpush2.msra.mxu0 0.0
        %797 = vmatprep.subr.mxu0 0.0
        %798 = vmatpush2.msra.mxu0 0.0
        %799 = vmatprep.subr.mxu0 0.0
        %800 = vmatpush2.msra.mxu0 0.0
        %801 = vmatprep.subr.mxu0 0.0
        %802 = vmatpush2.msra.mxu0 0.0
        %803 = vmatprep.subr.mxu0 0.0
        %804 = vmatpush2.msra.mxu0 0.0
        %805 = vmatprep.subr.mxu0 0.0
        %806 = vmatpush2.msra.mxu0 0.0
        %807 = vmatprep.subr.mxu0 0.0
        %808 = vmatpush2.msra.mxu0 0.0
        %809 = vmatprep.mubr.f32.mxu0 0.0
        %810 = vmatmul.mubr.f32.gmra.mxu0 %v743
        %v811 = vpop.f32.mrf.mxu0
        %v812 = vadd.f32 0.0, %v811
        %v813 = vpop.f32.mrf.mxu0
        %814 = vdwg.mxu0
        %v815 = vadd.f32 %v739, %v812
        %v816 = vxor.u32 %v815, 2147483648
        %v817 = vmul.f32 %v816, 1.442695
        %v818 = vpow.pop %v817
        %v819 = vadd.f32 %v818, 1.0
        %v820 = vrcp.pop %v819
        %v821 = vmul.f32 1.0, %v820
        %v822 = vtanh.pop %v815
        %v823 = vmul.f32 %v821, %v732
        %825 = vrot.lane.b32.xlu0 %v822, 64
        %v826 = vpop.permute.xlu0 %825
        %v828 = vmul.f32 %v821, %v826
        %830 = vrot.lane.b32.xlu0 %v828, 32
        %v831 = vpop.permute.xlu0 %830
        %v833 = vadd.f32 %v823, %v831
        %v834 = vtanh.pop %v833
        %836 = vrot.lane.b32.xlu0 %v834, 64
        %v837 = vpop.permute.xlu0 %836
        %v839 = vmul.f32 %v821, %v837
        %v840 = vld [vmem:[#allocation2 + $0x5] sm:$0x1]
        %842 = vrot.lane.b32.xlu0 %v839, 32
        %v843 = vpop.permute.xlu0 %842
        %v844 = vsel %vm337, %v843, 0
        %846 = vmatprep.subr.mxu0 0.0
        %847 = vmatpush1.msra.mxu0 0.0
        %848 = vmatprep.subr.mxu0 0.0
        %849 = vmatpush1.msra.mxu0 0.0
        %850 = vmatprep.subr.mxu0 0.0
        %851 = vmatpush1.msra.mxu0 0.0
        %852 = vmatprep.subr.mxu0 0.0
        %853 = vmatpush1.msra.mxu0 0.0
        %854 = vmatprep.subr.mxu0 0.0
        %855 = vmatpush1.msra.mxu0 0.0
        %856 = vmatprep.subr.mxu0 0.0
        %857 = vmatpush1.msra.mxu0 0.0
        %858 = vmatprep.subr.mxu0 0.0
        %859 = vmatpush1.msra.mxu0 0.0
        %860 = vmatprep.subr.mxu0 0.0
        %861 = vmatpush1.msra.mxu0 0.0
        %862 = vmatprep.subr.mxu0 0.0
        %863 = vmatpush1.msra.mxu0 0.0
        %864 = vmatprep.subr.mxu0 0.0
        %865 = vmatpush1.msra.mxu0 0.0
        %866 = vmatprep.subr.mxu0 0.0
        %867 = vmatpush1.msra.mxu0 0.0
        %868 = vmatprep.subr.mxu0 0.0
        %869 = vmatpush1.msra.mxu0 0.0
        %870 = vmatprep.subr.mxu0 0.0
        %871 = vmatpush1.msra.mxu0 %v335
        %872 = vmatprep.subr.mxu0 0.0
        %873 = vmatpush1.msra.mxu0 %v334
        %874 = vmatprep.subr.mxu0 0.0
        %875 = vmatpush1.msra.mxu0 %v333
        %876 = vmatprep.subr.mxu0 0.0
        %877 = vmatpush1.msra.mxu0 %v332
        %878 = vmatprep.subr.mxu0 0.0
        %879 = vmatpush2.msra.mxu0 0.0
        %880 = vmatprep.subr.mxu0 0.0
        %881 = vmatpush2.msra.mxu0 0.0
        %882 = vmatprep.subr.mxu0 0.0
        %883 = vmatpush2.msra.mxu0 0.0
        %884 = vmatprep.subr.mxu0 0.0
        %885 = vmatpush2.msra.mxu0 0.0
        %886 = vmatprep.subr.mxu0 0.0
        %887 = vmatpush2.msra.mxu0 0.0
        %888 = vmatprep.subr.mxu0 0.0
        %889 = vmatpush2.msra.mxu0 0.0
        %890 = vmatprep.subr.mxu0 0.0
        %891 = vmatpush2.msra.mxu0 0.0
        %892 = vmatprep.subr.mxu0 0.0
        %893 = vmatpush2.msra.mxu0 0.0
        %894 = vmatprep.subr.mxu0 0.0
        %895 = vmatpush2.msra.mxu0 0.0
        %896 = vmatprep.subr.mxu0 0.0
        %897 = vmatpush2.msra.mxu0 0.0
        %898 = vmatprep.subr.mxu0 0.0
        %899 = vmatpush2.msra.mxu0 0.0
        %900 = vmatprep.subr.mxu0 0.0
        %901 = vmatpush2.msra.mxu0 0.0
        %902 = vmatprep.subr.mxu0 0.0
        %903 = vmatpush2.msra.mxu0 0.0
        %904 = vmatprep.subr.mxu0 0.0
        %905 = vmatpush2.msra.mxu0 0.0
        %906 = vmatprep.subr.mxu0 0.0
        %907 = vmatpush2.msra.mxu0 0.0
        %908 = vmatprep.subr.mxu0 0.0
        %909 = vmatpush2.msra.mxu0 0.0
        %910 = vmatprep.mubr.f32.mxu0 0.0
        %911 = vmatmul.mubr.f32.gmra.mxu0 %v844
        %v912 = vpop.f32.mrf.mxu0
        %v913 = vadd.f32 0.0, %v912
        %v914 = vpop.f32.mrf.mxu0
        %915 = vdwg.mxu0
        %v916 = vadd.f32 %v840, %v913
        %v917 = vxor.u32 %v916, 2147483648
        %v918 = vmul.f32 %v917, 1.442695
        %v919 = vpow.pop %v918
        %v920 = vadd.f32 %v919, 1.0
        %v921 = vrcp.pop %v920
        %v922 = vmul.f32 1.0, %v921
        %v923 = vtanh.pop %v916
        %v924 = vmul.f32 %v922, %v833
        %926 = vrot.lane.b32.xlu0 %v923, 64
        %v927 = vpop.permute.xlu0 %926
        %v929 = vmul.f32 %v922, %v927
        %931 = vrot.lane.b32.xlu0 %v929, 32
        %v932 = vpop.permute.xlu0 %931
        %v934 = vadd.f32 %v924, %v932
        %v935 = vtanh.pop %v934
        %937 = vrot.lane.b32.xlu0 %v935, 64
        %v938 = vpop.permute.xlu0 %937
        %v940 = vmul.f32 %v922, %v938
        %v941 = vld [vmem:[#allocation2 + $0x6] sm:$0x1]
        %943 = vrot.lane.b32.xlu0 %v940, 32
        %v944 = vpop.permute.xlu0 %943
        %v945 = vsel %vm337, %v944, 0
        %947 = vmatprep.subr.mxu0 0.0
        %948 = vmatpush1.msra.mxu0 0.0
        %949 = vmatprep.subr.mxu0 0.0
        %950 = vmatpush1.msra.mxu0 0.0
        %951 = vmatprep.subr.mxu0 0.0
        %952 = vmatpush1.msra.mxu0 0.0
        %953 = vmatprep.subr.mxu0 0.0
        %954 = vmatpush1.msra.mxu0 0.0
        %955 = vmatprep.subr.mxu0 0.0
        %956 = vmatpush1.msra.mxu0 0.0
        %957 = vmatprep.subr.mxu0 0.0
        %958 = vmatpush1.msra.mxu0 0.0
        %959 = vmatprep.subr.mxu0 0.0
        %960 = vmatpush1.msra.mxu0 0.0
        %961 = vmatprep.subr.mxu0 0.0
        %962 = vmatpush1.msra.mxu0 0.0
        %963 = vmatprep.subr.mxu0 0.0
        %964 = vmatpush1.msra.mxu0 0.0
        %965 = vmatprep.subr.mxu0 0.0
        %966 = vmatpush1.msra.mxu0 0.0
        %967 = vmatprep.subr.mxu0 0.0
        %968 = vmatpush1.msra.mxu0 0.0
        %969 = vmatprep.subr.mxu0 0.0
        %970 = vmatpush1.msra.mxu0 0.0
        %971 = vmatprep.subr.mxu0 0.0
        %972 = vmatpush1.msra.mxu0 %v335
        %973 = vmatprep.subr.mxu0 0.0
        %974 = vmatpush1.msra.mxu0 %v334
        %975 = vmatprep.subr.mxu0 0.0
        %976 = vmatpush1.msra.mxu0 %v333
        %977 = vmatprep.subr.mxu0 0.0
        %978 = vmatpush1.msra.mxu0 %v332
        %979 = vmatprep.subr.mxu0 0.0
        %980 = vmatpush2.msra.mxu0 0.0
        %981 = vmatprep.subr.mxu0 0.0
        %982 = vmatpush2.msra.mxu0 0.0
        %983 = vmatprep.subr.mxu0 0.0
        %984 = vmatpush2.msra.mxu0 0.0
        %985 = vmatprep.subr.mxu0 0.0
        %986 = vmatpush2.msra.mxu0 0.0
        %987 = vmatprep.subr.mxu0 0.0
        %988 = vmatpush2.msra.mxu0 0.0
        %989 = vmatprep.subr.mxu0 0.0
        %990 = vmatpush2.msra.mxu0 0.0
        %991 = vmatprep.subr.mxu0 0.0
        %992 = vmatpush2.msra.mxu0 0.0
        %993 = vmatprep.subr.mxu0 0.0
        %994 = vmatpush2.msra.mxu0 0.0
        %995 = vmatprep.subr.mxu0 0.0
        %996 = vmatpush2.msra.mxu0 0.0
        %997 = vmatprep.subr.mxu0 0.0
        %998 = vmatpush2.msra.mxu0 0.0
        %999 = vmatprep.subr.mxu0 0.0
        %1000 = vmatpush2.msra.mxu0 0.0
        %1001 = vmatprep.subr.mxu0 0.0
        %1002 = vmatpush2.msra.mxu0 0.0
        %1003 = vmatprep.subr.mxu0 0.0
        %1004 = vmatpush2.msra.mxu0 0.0
        %1005 = vmatprep.subr.mxu0 0.0
        %1006 = vmatpush2.msra.mxu0 0.0
        %1007 = vmatprep.subr.mxu0 0.0
        %1008 = vmatpush2.msra.mxu0 0.0
        %1009 = vmatprep.subr.mxu0 0.0
        %1010 = vmatpush2.msra.mxu0 0.0
        %1011 = vmatprep.mubr.f32.mxu0 0.0
        %1012 = vmatmul.mubr.f32.gmra.mxu0 %v945
        %v1013 = vpop.f32.mrf.mxu0
        %v1014 = vadd.f32 0.0, %v1013
        %v1015 = vpop.f32.mrf.mxu0
        %1016 = vdwg.mxu0
        %v1017 = vadd.f32 %v941, %v1014
        %v1018 = vxor.u32 %v1017, 2147483648
        %v1019 = vmul.f32 %v1018, 1.442695
        %v1020 = vpow.pop %v1019
        %v1021 = vadd.f32 %v1020, 1.0
        %v1022 = vrcp.pop %v1021
        %v1023 = vmul.f32 1.0, %v1022
        %v1024 = vtanh.pop %v1017
        %v1025 = vmul.f32 %v1023, %v934
        %1027 = vrot.lane.b32.xlu0 %v1024, 64
        %v1028 = vpop.permute.xlu0 %1027
        %v1030 = vmul.f32 %v1023, %v1028
        %1032 = vrot.lane.b32.xlu0 %v1030, 32
        %v1033 = vpop.permute.xlu0 %1032
        %v1035 = vadd.f32 %v1025, %v1033
        %v1036 = vtanh.pop %v1035
        %1038 = vrot.lane.b32.xlu0 %v1036, 64
        %v1039 = vpop.permute.xlu0 %1038
        %v1041 = vmul.f32 %v1023, %v1039
        %v1042 = vld [vmem:[#allocation2 + $0x7] sm:$0x1]
        %1044 = vrot.lane.b32.xlu0 %v1041, 32
        %v1045 = vpop.permute.xlu0 %1044
        %v1046 = vsel %vm337, %v1045, 0
        %1048 = vmatprep.subr.mxu0 0.0
        %1049 = vmatpush1.msra.mxu0 0.0
        %1050 = vmatprep.subr.mxu0 0.0
        %1051 = vmatpush1.msra.mxu0 0.0
        %1052 = vmatprep.subr.mxu0 0.0
        %1053 = vmatpush1.msra.mxu0 0.0
        %1054 = vmatprep.subr.mxu0 0.0
        %1055 = vmatpush1.msra.mxu0 0.0
        %1056 = vmatprep.subr.mxu0 0.0
        %1057 = vmatpush1.msra.mxu0 0.0
        %1058 = vmatprep.subr.mxu0 0.0
        %1059 = vmatpush1.msra.mxu0 0.0
        %1060 = vmatprep.subr.mxu0 0.0
        %1061 = vmatpush1.msra.mxu0 0.0
        %1062 = vmatprep.subr.mxu0 0.0
        %1063 = vmatpush1.msra.mxu0 0.0
        %1064 = vmatprep.subr.mxu0 0.0
        %1065 = vmatpush1.msra.mxu0 0.0
        %1066 = vmatprep.subr.mxu0 0.0
        %1067 = vmatpush1.msra.mxu0 0.0
        %1068 = vmatprep.subr.mxu0 0.0
        %1069 = vmatpush1.msra.mxu0 0.0
        %1070 = vmatprep.subr.mxu0 0.0
        %1071 = vmatpush1.msra.mxu0 0.0
        %1072 = vmatprep.subr.mxu0 0.0
        %1073 = vmatpush1.msra.mxu0 %v335
        %1074 = vmatprep.subr.mxu0 0.0
        %1075 = vmatpush1.msra.mxu0 %v334
        %1076 = vmatprep.subr.mxu0 0.0
        %1077 = vmatpush1.msra.mxu0 %v333
        %1078 = vmatprep.subr.mxu0 0.0
        %1079 = vmatpush1.msra.mxu0 %v332
        %1080 = vmatprep.subr.mxu0 0.0
        %1081 = vmatpush2.msra.mxu0 0.0
        %1082 = vmatprep.subr.mxu0 0.0
        %1083 = vmatpush2.msra.mxu0 0.0
        %1084 = vmatprep.subr.mxu0 0.0
        %1085 = vmatpush2.msra.mxu0 0.0
        %1086 = vmatprep.subr.mxu0 0.0
        %1087 = vmatpush2.msra.mxu0 0.0
        %1088 = vmatprep.subr.mxu0 0.0
        %1089 = vmatpush2.msra.mxu0 0.0
        %1090 = vmatprep.subr.mxu0 0.0
        %1091 = vmatpush2.msra.mxu0 0.0
        %1092 = vmatprep.subr.mxu0 0.0
        %1093 = vmatpush2.msra.mxu0 0.0
        %1094 = vmatprep.subr.mxu0 0.0
        %1095 = vmatpush2.msra.mxu0 0.0
        %1096 = vmatprep.subr.mxu0 0.0
        %1097 = vmatpush2.msra.mxu0 0.0
        %1098 = vmatprep.subr.mxu0 0.0
        %1099 = vmatpush2.msra.mxu0 0.0
        %1100 = vmatprep.subr.mxu0 0.0
        %1101 = vmatpush2.msra.mxu0 0.0
        %1102 = vmatprep.subr.mxu0 0.0
        %1103 = vmatpush2.msra.mxu0 0.0
        %1104 = vmatprep.subr.mxu0 0.0
        %1105 = vmatpush2.msra.mxu0 0.0
        %1106 = vmatprep.subr.mxu0 0.0
        %1107 = vmatpush2.msra.mxu0 0.0
        %1108 = vmatprep.subr.mxu0 0.0
        %1109 = vmatpush2.msra.mxu0 0.0
        %1110 = vmatprep.subr.mxu0 0.0
        %1111 = vmatpush2.msra.mxu0 0.0
        %1112 = vmatprep.mubr.f32.mxu0 0.0
        %1113 = vmatmul.mubr.f32.gmra.mxu0 %v1046
        %v1114 = vpop.f32.mrf.mxu0
        %v1115 = vadd.f32 0.0, %v1114
        %v1116 = vpop.f32.mrf.mxu0
        %1117 = vdwg.mxu0
        %v1118 = vadd.f32 %v1042, %v1115
        %v1119 = vxor.u32 %v1118, 2147483648
        %v1120 = vmul.f32 %v1119, 1.442695
        %v1121 = vpow.pop %v1120
        %v1122 = vadd.f32 %v1121, 1.0
        %v1123 = vrcp.pop %v1122
        %v1124 = vmul.f32 1.0, %v1123
        %v1125 = vtanh.pop %v1118
        %v1126 = vmul.f32 %v1124, %v1035
        %1128 = vrot.lane.b32.xlu0 %v1125, 64
        %v1129 = vpop.permute.xlu0 %1128
        %v1131 = vmul.f32 %v1124, %v1129
        %1133 = vrot.lane.b32.xlu0 %v1131, 32
        %v1134 = vpop.permute.xlu0 %1133
        %v1136 = vadd.f32 %v1126, %v1134
        %v1137 = vtanh.pop %v1136
        %1139 = vrot.lane.b32.xlu0 %v1137, 64
        %v1140 = vpop.permute.xlu0 %1139
        %v1142 = vmul.f32 %v1124, %v1140
        %v1143 = vld [vmem:[#allocation9] sm:$0x1]
        %v1144 = vld [vmem:[#allocation9 + $0x1] sm:$0x1]
        %v1145 = vld [vmem:[#allocation9 + $0x2] sm:$0x1]
        %v1146 = vld [vmem:[#allocation9 + $0x3] sm:$0x1]
        %v1147 = vld [vmem:[#allocation9 + $0x4] sm:$0x1]
        %v1148 = vld [vmem:[#allocation9 + $0x5] sm:$0x1]
        %v1149 = vld [vmem:[#allocation9 + $0x6] sm:$0x1]
        %v1150 = vld [vmem:[#allocation9 + $0x7] sm:$0x1]
        %1152 = vrot.lane.b32.xlu0 %v1142, 32
        %v1153 = vpop.permute.xlu0 %1152
        %v1155 = vmul.f32 %v1143, %v1153
        %v1156 = vadd.f32 %v1155, %v1147
        %v1157 = vmul.f32 %v1144, %v1153
        %v1158 = vadd.f32 %v1157, %v1148
        %v1159 = vmul.f32 %v1145, %v1153
        %v1160 = vadd.f32 %v1159, %v1149
        %1161 = vxpose.xlu0.b32.start [1/16] %v1158, 128
        %1162 = vxpose.xlu0.b32.cont [2/16] 0.0, 128
        %1163 = vxpose.xlu0.b32.cont [3/16] 0.0, 128
        %1164 = vxpose.xlu0.b32.cont [4/16] 0.0, 128
        %1165 = vxpose.xlu0.b32.cont [5/16] 0.0, 128
        %1166 = vxpose.xlu0.b32.cont [6/16] 0.0, 128
        %1167 = vxpose.xlu0.b32.cont [7/16] 0.0, 128
        %1168 = vxpose.xlu0.b32.cont [8/16] 0.0, 128
        %1169 = vxpose.xlu0.b32.cont [9/16] 0.0, 128
        %1170 = vxpose.xlu0.b32.cont [10/16] 0.0, 128
        %1171 = vxpose.xlu0.b32.cont [11/16] 0.0, 128
        %1172 = vxpose.xlu0.b32.cont [12/16] 0.0, 128
        %1173 = vxpose.xlu0.b32.cont [13/16] 0.0, 128
        %1174 = vxpose.xlu0.b32.cont [14/16] 0.0, 128
        %1175 = vxpose.xlu0.b32.cont [15/16] 0.0, 128
        %1176 = vxpose.xlu0.b32.end [16/16] 0.0, 128
        %v1177 = vpop.trf.xlu0
        %v1178 = vpop.trf.xlu0
        %v1179 = vpop.trf.xlu0
        %v1180 = vpop.trf.xlu0
        %v1181 = vpop.trf.xlu0
        %v1182 = vpop.trf.xlu0
        %v1183 = vpop.trf.xlu0
        %v1184 = vpop.trf.xlu0
        %v1185 = vpop.trf.xlu0
        %v1186 = vpop.trf.xlu0
        %v1187 = vpop.trf.xlu0
        %v1188 = vpop.trf.xlu0
        %v1189 = vpop.trf.xlu0
        %v1190 = vpop.trf.xlu0
        %v1191 = vpop.trf.xlu0
        %v1192 = vpop.trf.xlu0
        %vm1193 = vcmask 7168
        %v1195 = vsel %vm1193, %v1177, 0
        %v1198 = vsel %vm1193, %v1178, 0
        %v1201 = vsel %vm1193, %v1179, 0
        %v1204 = vsel %vm1193, %v1180, 0
        %vm1206 = vcmask 1040384
        %v1208 = vsel %vm1206, %v1156, 0
        %1210 = vmatprep.subr.mxu0 0.0
        %1211 = vmatpush1.msra.mxu0 0.0
        %1212 = vmatprep.subr.mxu0 0.0
        %1213 = vmatpush1.msra.mxu0 0.0
        %1214 = vmatprep.subr.mxu0 0.0
        %1215 = vmatpush1.msra.mxu0 0.0
        %1216 = vmatprep.subr.mxu0 0.0
        %1217 = vmatpush1.msra.mxu0 0.0
        %1218 = vmatprep.subr.mxu0 0.0
        %1219 = vmatpush1.msra.mxu0 0.0
        %1220 = vmatprep.subr.mxu0 0.0
        %1221 = vmatpush1.msra.mxu0 0.0
        %1222 = vmatprep.subr.mxu0 0.0
        %1223 = vmatpush1.msra.mxu0 0.0
        %1224 = vmatprep.subr.mxu0 0.0
        %1225 = vmatpush1.msra.mxu0 0.0
        %1226 = vmatprep.subr.mxu0 0.0
        %1227 = vmatpush1.msra.mxu0 0.0
        %1228 = vmatprep.subr.mxu0 0.0
        %1229 = vmatpush1.msra.mxu0 0.0
        %1230 = vmatprep.subr.mxu0 0.0
        %1231 = vmatpush1.msra.mxu0 0.0
        %1232 = vmatprep.subr.mxu0 0.0
        %1233 = vmatpush1.msra.mxu0 0.0
        %1234 = vmatprep.subr.mxu0 0.0
        %1235 = vmatpush1.msra.mxu0 0.0
        %1236 = vmatprep.subr.mxu0 0.0
        %1237 = vmatpush1.msra.mxu0 0.0
        %1238 = vmatprep.subr.mxu0 0.0
        %1239 = vmatpush1.msra.mxu0 0.0
        %1240 = vmatprep.subr.mxu0 0.0
        %1241 = vmatpush1.msra.mxu0 %v1208
        %1242 = vmatprep.subr.mxu0 0.0
        %1243 = vmatpush2.msra.mxu0 0.0
        %1244 = vmatprep.subr.mxu0 0.0
        %1245 = vmatpush2.msra.mxu0 0.0
        %1246 = vmatprep.subr.mxu0 0.0
        %1247 = vmatpush2.msra.mxu0 0.0
        %1248 = vmatprep.subr.mxu0 0.0
        %1249 = vmatpush2.msra.mxu0 0.0
        %1250 = vmatprep.subr.mxu0 0.0
        %1251 = vmatpush2.msra.mxu0 0.0
        %1252 = vmatprep.subr.mxu0 0.0
        %1253 = vmatpush2.msra.mxu0 0.0
        %1254 = vmatprep.subr.mxu0 0.0
        %1255 = vmatpush2.msra.mxu0 0.0
        %1256 = vmatprep.subr.mxu0 0.0
        %1257 = vmatpush2.msra.mxu0 0.0
        %1258 = vmatprep.subr.mxu0 0.0
        %1259 = vmatpush2.msra.mxu0 0.0
        %1260 = vmatprep.subr.mxu0 0.0
        %1261 = vmatpush2.msra.mxu0 0.0
        %1262 = vmatprep.subr.mxu0 0.0
        %1263 = vmatpush2.msra.mxu0 0.0
        %1264 = vmatprep.subr.mxu0 0.0
        %1265 = vmatpush2.msra.mxu0 0.0
        %1266 = vmatprep.subr.mxu0 0.0
        %1267 = vmatpush2.msra.mxu0 0.0
        %1268 = vmatprep.subr.mxu0 0.0
        %1269 = vmatpush2.msra.mxu0 0.0
        %1270 = vmatprep.subr.mxu0 0.0
        %1271 = vmatpush2.msra.mxu0 0.0
        %1272 = vmatprep.subr.mxu0 0.0
        %1273 = vmatpush2.msra.mxu0 0.0
        %1274 = vmatprep.mubr.f32.mxu0 0.0
        %1275 = vmatmul.mubr.f32.gmra.mxu0 %v1195
        %v1276 = vpop.f32.mrf.mxu0
        %v1277 = vadd.f32 0.0, %v1276
        %v1278 = vpop.f32.mrf.mxu0
        %1279 = vmatprep.mubr.f32.mxu0 0.0
        %1280 = vmatmul.mubr.f32.gmra.mxu0 %v1198
        %v1281 = vpop.f32.mrf.mxu0
        %v1282 = vadd.f32 0.0, %v1281
        %v1283 = vpop.f32.mrf.mxu0
        %1284 = vmatprep.mubr.f32.mxu0 0.0
        %1285 = vmatmul.mubr.f32.gmra.mxu0 %v1201
        %v1286 = vpop.f32.mrf.mxu0
        %v1287 = vadd.f32 0.0, %v1286
        %v1288 = vpop.f32.mrf.mxu0
        %1289 = vmatprep.mubr.f32.mxu0 0.0
        %1290 = vmatmul.mubr.f32.gmra.mxu0 %v1204
        %v1291 = vpop.f32.mrf.mxu0
        %v1292 = vadd.f32 0.0, %v1291
        %v1293 = vpop.f32.mrf.mxu0
        %1294 = vdwg.mxu0
        %v1295 = vsel %vm337, %v1277, -inf
        %v1296 = vsel %vm337, %v1282, -inf
        %v1297 = vsel %vm337, %v1287, -inf
        %v1298 = vsel %vm337, %v1292, -inf
        %v1299 = vmax.f32 %v1295, %v1296
        %v1300 = vmax.f32 %v1297, %v1298
        %v1301 = vmax.f32 %v1299, %v1300
        %v1302 = vrot.slane %v1301, 4
        %v1303 = vmax.f32 %v1301, %v1302
        %v1304 = vrot.slane %v1303, 2
        %v1305 = vmax.f32 %v1303, %v1304
        %v1306 = vrot.slane %v1305, 1
        %v1307 = vmax.f32 %v1305, %v1306
        %v1308 = vsub.f32 %v1277, %v1307
        %v1309 = vsub.f32 %v1282, %v1307
        %v1310 = vsub.f32 %v1287, %v1307
        %v1311 = vsub.f32 %v1292, %v1307
        %v1312 = vmul.f32 %v1308, 1.442695
        %v1313 = vpow.pop %v1312
        %v1314 = vmul.f32 %v1309, 1.442695
        %v1315 = vpow.pop %v1314
        %v1316 = vmul.f32 %v1310, 1.442695
        %v1317 = vpow.pop %v1316
        %v1318 = vmul.f32 %v1311, 1.442695
        %v1319 = vpow.pop %v1318
        %v1320 = vsel %vm337, %v1313, 0.0
        %v1321 = vsel %vm337, %v1315, 0.0
        %v1322 = vadd.f32 %v1320, %v1321
        %v1323 = vsel %vm337, %v1317, 0.0
        %v1324 = vadd.f32 %v1322, %v1323
        %v1325 = vsel %vm337, %v1319, 0.0
        %v1326 = vadd.f32 %v1324, %v1325
        %v1327 = vrot.slane %v1326, 4
        %v1328 = vadd.f32 %v1326, %v1327
        %v1329 = vrot.slane %v1328, 2
        %v1330 = vadd.f32 %v1328, %v1329
        %v1331 = vrot.slane %v1330, 1
        %v1332 = vadd.f32 %v1330, %v1331
        %v1334 = vsel %vm337, %v1160, 0
        %1336 = vmatprep.subr.mxu0 0.0
        %1337 = vmatpush1.msra.mxu0 0.0
        %1338 = vmatprep.subr.mxu0 0.0
        %1339 = vmatpush1.msra.mxu0 0.0
        %1340 = vmatprep.subr.mxu0 0.0
        %1341 = vmatpush1.msra.mxu0 0.0
        %1342 = vmatprep.subr.mxu0 0.0
        %1343 = vmatpush1.msra.mxu0 0.0
        %1344 = vmatprep.subr.mxu0 0.0
        %1345 = vmatpush1.msra.mxu0 0.0
        %1346 = vmatprep.subr.mxu0 0.0
        %1347 = vmatpush1.msra.mxu0 0.0
        %1348 = vmatprep.subr.mxu0 0.0
        %1349 = vmatpush1.msra.mxu0 0.0
        %1350 = vmatprep.subr.mxu0 0.0
        %1351 = vmatpush1.msra.mxu0 0.0
        %1352 = vmatprep.subr.mxu0 0.0
        %1353 = vmatpush1.msra.mxu0 0.0
        %1354 = vmatprep.subr.mxu0 0.0
        %1355 = vmatpush1.msra.mxu0 0.0
        %1356 = vmatprep.subr.mxu0 0.0
        %1357 = vmatpush1.msra.mxu0 0.0
        %1358 = vmatprep.subr.mxu0 0.0
        %1359 = vmatpush1.msra.mxu0 0.0
        %1360 = vmatprep.subr.mxu0 0.0
        %1361 = vmatpush1.msra.mxu0 %v1319
        %1362 = vmatprep.subr.mxu0 0.0
        %1363 = vmatpush1.msra.mxu0 %v1317
        %1364 = vmatprep.subr.mxu0 0.0
        %1365 = vmatpush1.msra.mxu0 %v1315
        %1366 = vmatprep.subr.mxu0 0.0
        %1367 = vmatpush1.msra.mxu0 %v1313
        %1368 = vmatprep.subr.mxu0 0.0
        %1369 = vmatpush2.msra.mxu0 0.0
        %1370 = vmatprep.subr.mxu0 0.0
        %1371 = vmatpush2.msra.mxu0 0.0
        %1372 = vmatprep.subr.mxu0 0.0
        %1373 = vmatpush2.msra.mxu0 0.0
        %1374 = vmatprep.subr.mxu0 0.0
        %1375 = vmatpush2.msra.mxu0 0.0
        %1376 = vmatprep.subr.mxu0 0.0
        %1377 = vmatpush2.msra.mxu0 0.0
        %1378 = vmatprep.subr.mxu0 0.0
        %1379 = vmatpush2.msra.mxu0 0.0
        %1380 = vmatprep.subr.mxu0 0.0
        %1381 = vmatpush2.msra.mxu0 0.0
        %1382 = vmatprep.subr.mxu0 0.0
        %1383 = vmatpush2.msra.mxu0 0.0
        %1384 = vmatprep.subr.mxu0 0.0
        %1385 = vmatpush2.msra.mxu0 0.0
        %1386 = vmatprep.subr.mxu0 0.0
        %1387 = vmatpush2.msra.mxu0 0.0
        %1388 = vmatprep.subr.mxu0 0.0
        %1389 = vmatpush2.msra.mxu0 0.0
        %1390 = vmatprep.subr.mxu0 0.0
        %1391 = vmatpush2.msra.mxu0 0.0
        %1392 = vmatprep.subr.mxu0 0.0
        %1393 = vmatpush2.msra.mxu0 0.0
        %1394 = vmatprep.subr.mxu0 0.0
        %1395 = vmatpush2.msra.mxu0 0.0
        %1396 = vmatprep.subr.mxu0 0.0
        %1397 = vmatpush2.msra.mxu0 0.0
        %1398 = vmatprep.subr.mxu0 0.0
        %1399 = vmatpush2.msra.mxu0 0.0
        %1400 = vmatprep.mubr.f32.mxu0 0.0
        %1401 = vmatmul.mubr.f32.gmra.mxu0 %v1334
        %v1402 = vpop.f32.mrf.mxu0
        %v1403 = vadd.f32 0.0, %v1402
        %v1404 = vpop.f32.mrf.mxu0
        %1405 = vdwg.mxu0
        %v1406 = vrcp.pop %v1332
        %v1407 = vmul.f32 %v1403, %v1406
        %v1408 = vmul.f32 %v1146, %v1407
        %v1409 = vadd.f32 %v1408, %v1150
        %vm1410 = vcmask 253952
        %1411 = vst.msk [vmem:[%s253] sm:$0x1] %vm1410, %v1409
        %s1412 = sand.u32 %s120, 1
        %s1413 = scalar_lea.sflag [#allocation5], %s1412
        %s1414 = sand.u32 %s120, 1
        %s1415 = scalar_lea.vmem [#allocation11], %s1414
        // Predicated region
        $region53: #{tpu_custom_call.1} parent=35 // pred_check
          %p1416 = pneg %p130
        $region54: #{tpu_custom_call.1} parent=35 // pred_check_branch
          %1418 = sbr.rel (%p1416) target = $region56
        $region55: #{tpu_custom_call.1} parent=35 // pred_region
          %s1420 = ssub.s32 16, 16
          %1421 = vsyncadd %s1413, %s1420
          %s1422 = smul.addr %s23, 16
          %s1423 = scalar_lea.hbm %s4, %s1422
          %s1425 = sshll.u32 %s1415, 4
          %s1426 = int_to_ptr.vmem [resolvable:$true] %s1425
          %1428 = dma.vmem_to_hbm [thread:$0]  %s1426, 16, %s1423, %s1413
        $region56: #{tpu_custom_call.1} parent=35 // pred_fallthru
          _
      $region36: #{tpu_custom_call.1} parent=5 // pred_fallthru
        _
      %p1429 = scmp.le.s32.totalorder 2, %s18
      // Predicated region
      $region57: #{tpu_custom_call.1} parent=5 // pred_check
        %p1430 = pneg %p1429
      $region58: #{tpu_custom_call.1} parent=5 // pred_check_branch
        %1432 = sbr.rel (%p1430) target = $region60
      $region59: #{tpu_custom_call.1} parent=5 // pred_region
        %s1433 = ssub.s32 %s18, 2
        // Predicated region
        $region61: #{tpu_custom_call.1} parent=59 // pred_check
          %p1434 = pneg %p136
        $region62: #{tpu_custom_call.1} parent=59 // pred_check_branch
          %1436 = sbr.rel (%p1434) target = $region64
        $region63: #{tpu_custom_call.1} parent=59 // pred_region
          %s1437 = sand.u32 %s121, 1
          %s1438 = scalar_lea.sflag [#allocation5], %s1437
          %s1439 = sand.u32 %s121, 1
          %s1440 = scalar_lea.vmem [#allocation11], %s1439
          %1441 = dma.done %s1438, 16
        $region64: #{tpu_custom_call.1} parent=59 // pred_fallthru
          _
      $region60: #{tpu_custom_call.1} parent=5 // pred_fallthru
        _
    $region6: #{tpu_custom_call.1} parent=1 // loop_footer
      %s22 = sadd.s32 1, %s18
    $region7: #{tpu_custom_call.1} parent=1 // loop_footer_branch
      %17 = sbr.rel target = $region3
    $region8: #{tpu_custom_call.1} parent=1 // loop_exit
      _
    %1442 = vsyncpa [#allocation4], 1
    %s1443 = scalar_lea.sflag [#allocation4], 1
    %1444 = vsyncpa %s1443, 1
    %1445 = vsyncpa [#allocation7], 1
    %1446 = vsyncpa [#allocation10], 1
    %1447 = vsyncpa [#allocation5], 1
    %s1448 = scalar_lea.sflag [#allocation5], 1
    %1449 = vsyncpa %s1448, 1

</llo_original>
